<compile_context>
chip_gen: v5e
topology: v5e:2x2
jax: 0.10.0
libtpu: 0.0.40
codegen_flags: <defaults>
</compile_context>

<pallas_src>
import numpy as np
import jax
import jax.numpy as jnp
from jax.experimental import pallas as pl
from jax.experimental.pallas import tpu as pltpu

C_PAD = 128        # lane width every per-tap block / activation is padded to
_EPS = 1e-5


def _round_up(x, m):
    return (x + m - 1) // m * m


def _flat_selection(B, Hi, Wi, kh, kw, stride, pad, m_in_pad):
    """Flattened 0/1 selection matrix S_flat: (M_out_pad, taps*m_in_pad).

    S_flat[out_r, t*m_in_pad + in_r] = 1 iff kernel tap t of the transposed conv
    maps input row in_r to output row out_r.  Rows are spatial-major:
    r = (h*W + w)*B + b.  Dilation holes / padding are simply absent (zeros).
    Built with numpy at trace time (all shapes static).
    """
    Ho = (Hi - 1) * stride - 2 * pad + kh
    Wo = (Wi - 1) * stride - 2 * pad + kw
    Hd = (Hi - 1) * stride + 1
    Wd = (Wi - 1) * stride + 1
    ph, pw = kh - 1 - pad, kw - 1 - pad
    m_out = B * Ho * Wo
    m_out_pad = _round_up(m_out, 8)
    S = np.zeros((m_out_pad, kh * kw * m_in_pad), np.float32)
    for i in range(kh):
        for j in range(kw):
            t = i * kw + j
            for ho in range(Ho):
                hd = ho + i - ph
                if hd < 0 or hd >= Hd or hd % stride:
                    continue
                hi = hd // stride
                for wo in range(Wo):
                    wd = wo + j - pw
                    if wd < 0 or wd >= Wd or wd % stride:
                        continue
                    wi = wd // stride
                    for b in range(B):
                        out_r = (ho * Wo + wo) * B + b
                        in_r = (hi * Wi + wi) * B + b
                        S[out_r, t * m_in_pad + in_r] = 1.0
    return S, Ho, Wo, m_out, m_out_pad


def _pack_taps(w):
    """PyTorch ConvTranspose2d weight (Cin,Cout,kh,kw) -> (Cin, taps*C_PAD).

    Tap t = i*kw+j holds the flipped kernel tap w[:, :, kh-1-i, kw-1-j], zero-padded
    to C_PAD lanes, so Z = Y @ W_all yields 128-lane-aligned per-tap column blocks.
    """
    Cin, Cout, kh, kw = w.shape
    wf = w[:, :, ::-1, ::-1]                                     # flip taps
    wt = jnp.transpose(wf, (2, 3, 0, 1)).reshape(kh * kw, Cin, Cout)
    wt = jnp.pad(wt, ((0, 0), (0, 0), (0, C_PAD - Cout)))        # lane pad
    return jnp.transpose(wt, (1, 0, 2)).reshape(Cin, kh * kw * C_PAD)


@jax.jit
def netGv_forward(noise_nchw, params):
    B, nz, H0, W0 = noise_nchw.shape

    # Input rows, spatial-major r = (h*W0 + w)*B + b, zero-padded to 8 rows.
    x2d = jnp.transpose(noise_nchw, (2, 3, 0, 1)).reshape(H0 * W0 * B, nz)
    m0 = H0 * W0 * B
    m0_pad = _round_up(m0, 8)
    x0 = jnp.pad(x2d.astype(jnp.float32), ((0, m0_pad - m0), (0, 0)))

    layer_cfg = (("w1", 1, 0), ("w2", 2, 1), ("w3", 2, 1), ("w4", 1, 1))

    Hi, Wi, m_in_pad = H0, W0, m0_pad
    S_list, W_list, cin_list, m_true, m_pad = [], [], [], [], []
    for name, stride, pad in layer_cfg:
        w = params[name]
        kh, kw = int(w.shape[2]), int(w.shape[3])
        S, Hi, Wi, m_out, m_out_pad = _flat_selection(
            B, Hi, Wi, kh, kw, stride, pad, m_in_pad)
        S_list.append(jnp.asarray(S, dtype=jnp.bfloat16))        # 0/1: exact in bf16
        W_list.append(_pack_taps(w).astype(jnp.bfloat16))
        cin_list.append(int(w.shape[0]))
        m_true.append(m_out)
        m_pad.append(m_out_pad)
        m_in_pad = m_out_pad

    Hf, Wf = Hi, Wi
    Cout = int(params["w4"].shape[1])
    m_final, m_final_pad = m_true[-1], m_pad[-1]

    # All BatchNorm gamma/beta in one lane-padded (6, 128) array (zeros beyond C).
    def _bn_row(v):
        v = v.astype(jnp.float32)
        return jnp.pad(v, (0, C_PAD - v.shape[0]))[None, :]
    bn = jnp.concatenate(
        [_bn_row(params[k]) for k in ("g1", "b1", "g2", "b2", "g3", "b3")], axis=0)

    def kernel(x_ref, w1_ref, s1_ref, w2_ref, s2_ref, w3_ref, s3_ref,
               w4_ref, s4_ref, bn_ref, o_ref):
        def convt(y, w_ref, s_ref, cin):
            # Transposed conv as two MXU matmuls: taps packed along lanes,
            # then tap-stacked along sublanes for the selection matmul.
            taps = w_ref.shape[1] // C_PAD
            z = jnp.dot(y[:, :cin], w_ref[...],
                        preferred_element_type=jnp.float32)      # (m_in_pad, taps*128)
            zst = jnp.concatenate(
                [z[:, t * C_PAD:(t + 1) * C_PAD] for t in range(taps)],
                axis=0).astype(jnp.bfloat16)                     # (taps*m_in_pad, 128)
            return jnp.dot(s_ref[...], zst,
                           preferred_element_type=jnp.float32)   # (m_out_pad, 128)

        def bn_relu(y, g, b, n_true):
            # Training-mode BatchNorm (batch stats, biased var) + ReLU; stats over
            # the n_true real rows only (padded rows masked out, then zeroed).
            rows = y.shape[0]
            if n_true < rows:
                valid = jax.lax.broadcasted_iota(jnp.int32, y.shape, 0) < n_true
                mean = jnp.sum(jnp.where(valid, y, 0.0), axis=0,
                               keepdims=True) / n_true
                d = jnp.where(valid, y - mean, 0.0)
                var = jnp.sum(d * d, axis=0, keepdims=True) / n_true
            else:
                valid = None
                mean = jnp.mean(y, axis=0, keepdims=True)
                var = jnp.mean(jnp.square(y - mean), axis=0, keepdims=True)
            scale = g * jax.lax.rsqrt(var + _EPS)
            shift = b - mean * scale
            out = jnp.maximum(y * scale + shift, 0.0)
            if valid is not None:
                out = jnp.where(valid, out, 0.0)                 # keep pad rows at 0
            return out.astype(jnp.bfloat16)

        bnv = bn_ref[...]                                        # (6, 128) f32
        y = x_ref[...].astype(jnp.bfloat16)                      # (m0_pad, nz)
        y = bn_relu(convt(y, w1_ref, s1_ref, cin_list[0]),
                    bnv[0:1, :], bnv[1:2, :], m_true[0])         # (8, 128)
        y = bn_relu(convt(y, w2_ref, s2_ref, cin_list[1]),
                    bnv[2:3, :], bnv[3:4, :], m_true[1])         # (24, 128)
        y = bn_relu(convt(y, w3_ref, s3_ref, cin_list[2]),
                    bnv[4:5, :], bnv[5:6, :], m_true[2])         # (56, 128)
        o_ref[...] = jnp.tanh(convt(y, w4_ref, s4_ref, cin_list[3]))

    args = (x0,
            W_list[0], S_list[0], W_list[1], S_list[1],
            W_list[2], S_list[2], W_list[3], S_list[3], bn)

    def full_spec(a):
        nd = a.ndim
        return pl.BlockSpec(a.shape, lambda i, nd=nd: (0,) * nd)

    # Advisory cost hint for XLA scheduling around the custom call.
    flops = 0
    mp_prev = m0_pad
    for li in range(4):
        taps = W_list[li].shape[1] // C_PAD
        flops += 2 * mp_prev * cin_list[li] * W_list[li].shape[1]
        flops += 2 * m_pad[li] * (taps * mp_prev) * C_PAD
        mp_prev = m_pad[li]
    bytes_accessed = sum(int(np.prod(a.shape)) * a.dtype.itemsize for a in args)
    bytes_accessed += m_final_pad * C_PAD * 4
    cost = pl.CostEstimate(flops=int(flops),
                           transcendentals=int(m_final_pad * C_PAD + 3 * C_PAD),
                           bytes_accessed=int(bytes_accessed))

    out_pad = pl.pallas_call(
        kernel,
        out_shape=jax.ShapeDtypeStruct((m_final_pad, C_PAD), jnp.float32),
        grid=(1,),
        in_specs=[full_spec(a) for a in args],
        out_specs=pl.BlockSpec((m_final_pad, C_PAD), lambda i: (0, 0)),
        compiler_params=pltpu.CompilerParams(
            dimension_semantics=("arbitrary",)),
        cost_estimate=cost,
    )(*args)

    out = out_pad[:m_final, :Cout].reshape(Hf, Wf, B, Cout)
    return jnp.transpose(out, (2, 3, 0, 1))                      # -> NCHW


def init_params(key, output_channels=3, nz=100, nfm=32):
    k1, k2, k3, k4 = jax.random.split(key, 4)
    return {
        # PyTorch ConvTranspose2d weight layout: (in_ch, out_ch, kh, kw)
        "w1": 0.05 * jax.random.normal(k1, (nz, nfm * 2, 2, 2), jnp.float32),
        "w2": 0.05 * jax.random.normal(k2, (nfm * 2, nfm, 3, 3), jnp.float32),
        "w3": 0.05 * jax.random.normal(k3, (nfm, nfm, 3, 3), jnp.float32),
        "w4": 0.05 * jax.random.normal(k4, (nfm, output_channels, 3, 3), jnp.float32),
        # BatchNorm affine params (PyTorch default init: weight=1, bias=0)
        "g1": jnp.ones((nfm * 2,), jnp.float32),
        "b1": jnp.zeros((nfm * 2,), jnp.float32),
        "g2": jnp.ones((nfm,), jnp.float32),
        "b2": jnp.zeros((nfm,), jnp.float32),
        "g3": jnp.ones((nfm,), jnp.float32),
        "b3": jnp.zeros((nfm,), jnp.float32),
    }


if __name__ == "__main__":
    key = jax.random.PRNGKey(0)
    pkey, nkey = jax.random.split(key)

    output_channels, nz, nfm, batch = 3, 100, 32, 2
    params = init_params(pkey, output_channels=output_channels, nz=nz, nfm=nfm)

    noise = jax.random.normal(nkey, (batch, nz, 1, 1), jnp.float32)  # 1x1 latent

    out = jax.block_until_ready(netGv_forward(noise, params))

    assert out.shape == (batch, output_channels, 5, 5), out.shape
    assert bool(jnp.all(jnp.isfinite(out)))
    print("KERNEL_OK")
</pallas_src>

<mosaic_0001>
module attributes {stable_mosaic.version = 11 : i64} {
  func.func @kernel(%arg0: i32, %arg1: memref<8x100xf32, #tpu.memory_space<vmem>>, %arg2: memref<100x512xbf16, #tpu.memory_space<vmem>>, %arg3: memref<8x32xbf16, #tpu.memory_space<vmem>>, %arg4: memref<64x1152xbf16, #tpu.memory_space<vmem>>, %arg5: memref<24x72xbf16, #tpu.memory_space<vmem>>, %arg6: memref<32x1152xbf16, #tpu.memory_space<vmem>>, %arg7: memref<56x216xbf16, #tpu.memory_space<vmem>>, %arg8: memref<32x1152xbf16, #tpu.memory_space<vmem>>, %arg9: memref<56x504xbf16, #tpu.memory_space<vmem>>, %arg10: memref<6x128xf32, #tpu.memory_space<vmem>>, %arg11: memref<56x128xf32, #tpu.memory_space<vmem>>) attributes {dimension_semantics = [#tpu.dimension_semantics<arbitrary>], iteration_bounds = array<i64: 1>, scalar_prefetch = 0 : i64, scratch_operands = 0 : i64, tpu.core_type = #tpu.core_type<tc>, window_params = [{pipeline_mode = #tpu.pipeline_mode<synchronous>, transform_indices = @transform_0, window_bounds = array<i64: 8, 100>}, {pipeline_mode = #tpu.pipeline_mode<synchronous>, transform_indices = @transform_1, window_bounds = array<i64: 100, 512>}, {pipeline_mode = #tpu.pipeline_mode<synchronous>, transform_indices = @transform_2, window_bounds = array<i64: 8, 32>}, {pipeline_mode = #tpu.pipeline_mode<synchronous>, transform_indices = @transform_3, window_bounds = array<i64: 64, 1152>}, {pipeline_mode = #tpu.pipeline_mode<synchronous>, transform_indices = @transform_4, window_bounds = array<i64: 24, 72>}, {pipeline_mode = #tpu.pipeline_mode<synchronous>, transform_indices = @transform_5, window_bounds = array<i64: 32, 1152>}, {pipeline_mode = #tpu.pipeline_mode<synchronous>, transform_indices = @transform_6, window_bounds = array<i64: 56, 216>}, {pipeline_mode = #tpu.pipeline_mode<synchronous>, transform_indices = @transform_7, window_bounds = array<i64: 32, 1152>}, {pipeline_mode = #tpu.pipeline_mode<synchronous>, transform_indices = @transform_8, window_bounds = array<i64: 56, 504>}, {pipeline_mode = #tpu.pipeline_mode<synchronous>, transform_indices = @transform_9, window_bounds = array<i64: 6, 128>}, {pipeline_mode = #tpu.pipeline_mode<synchronous>, transform_indices = @transform_10, window_bounds = array<i64: 56, 128>}]} {
    %c0 = arith.constant 0 : index
    %c0_0 = arith.constant 0 : index
    %0 = vector.load %arg10[%c0, %c0_0] : memref<6x128xf32, #tpu.memory_space<vmem>>, vector<6x128xf32>
    %c0_1 = arith.constant 0 : index
    %c0_2 = arith.constant 0 : index
    %1 = vector.load %arg1[%c0_1, %c0_2] : memref<8x100xf32, #tpu.memory_space<vmem>>, vector<8x100xf32>
    %2 = arith.truncf %1 : vector<8x100xf32> to vector<8x100xbf16>
    %c0_3 = arith.constant 0 : index
    %c0_4 = arith.constant 0 : index
    %3 = vector.load %arg2[%c0_3, %c0_4] : memref<100x512xbf16, #tpu.memory_space<vmem>>, vector<100x512xbf16>
    %cst = arith.constant dense<0.000000e+00> : vector<8x512xf32>
    %4 = tpu.matmul %2, %3, %cst {dimension_numbers = #tpu.dot_dimension_numbers<[1], [0], [0], [1], [0, 0, 1, 1], [], []>} : vector<8x100xbf16>, vector<100x512xbf16>, vector<8x512xf32> -> vector<8x512xf32>
    %5 = vector.extract_strided_slice %4 {offsets = [0, 0], sizes = [8, 128], strides = [1, 1]} : vector<8x512xf32> to vector<8x128xf32>
    %6 = vector.extract_strided_slice %4 {offsets = [0, 128], sizes = [8, 128], strides = [1, 1]} : vector<8x512xf32> to vector<8x128xf32>
    %7 = vector.extract_strided_slice %4 {offsets = [0, 256], sizes = [8, 128], strides = [1, 1]} : vector<8x512xf32> to vector<8x128xf32>
    %8 = vector.extract_strided_slice %4 {offsets = [0, 384], sizes = [8, 128], strides = [1, 1]} : vector<8x512xf32> to vector<8x128xf32>
    %9 = tpu.concatenate %5, %6, %7, %8 in 0 : vector<8x128xf32>, vector<8x128xf32>, vector<8x128xf32>, vector<8x128xf32> -> vector<32x128xf32>
    %10 = arith.truncf %9 : vector<32x128xf32> to vector<32x128xbf16>
    %c0_5 = arith.constant 0 : index
    %c0_6 = arith.constant 0 : index
    %11 = vector.load %arg3[%c0_5, %c0_6] : memref<8x32xbf16, #tpu.memory_space<vmem>>, vector<8x32xbf16>
    %cst_7 = arith.constant dense<0.000000e+00> : vector<8x128xf32>
    %12 = tpu.matmul %11, %10, %cst_7 {dimension_numbers = #tpu.dot_dimension_numbers<[1], [0], [0], [1], [0, 0, 1, 1], [], []>} : vector<8x32xbf16>, vector<32x128xbf16>, vector<8x128xf32> -> vector<8x128xf32>
    %13 = vector.extract_strided_slice %0 {offsets = [0, 0], sizes = [1, 128], strides = [1, 1]} : vector<6x128xf32> to vector<1x128xf32>
    %14 = vector.extract_strided_slice %0 {offsets = [1, 0], sizes = [1, 128], strides = [1, 1]} : vector<6x128xf32> to vector<1x128xf32>
    %cst_8 = arith.constant dense<0.000000e+00> : vector<128xf32>
    %15 = vector.multi_reduction <add>, %12, %cst_8 [0] : vector<8x128xf32> to vector<128xf32>
    %16 = vector.shape_cast %15 : vector<128xf32> to vector<1x128xf32>
    %cst_9 = arith.constant 8.000000e+00 : f32
    %17 = vector.broadcast %cst_9 : f32 to vector<1x128xf32>
    %18 = arith.divf %16, %17 : vector<1x128xf32>
    %19 = vector.broadcast %18 : vector<1x128xf32> to vector<8x128xf32>
    %20 = arith.subf %12, %19 : vector<8x128xf32>
    %21 = arith.mulf %20, %20 : vector<8x128xf32>
    %cst_10 = arith.constant dense<0.000000e+00> : vector<128xf32>
    %22 = vector.multi_reduction <add>, %21, %cst_10 [0] : vector<8x128xf32> to vector<128xf32>
    %23 = vector.shape_cast %22 : vector<128xf32> to vector<1x128xf32>
    %cst_11 = arith.constant 8.000000e+00 : f32
    %24 = vector.broadcast %cst_11 : f32 to vector<1x128xf32>
    %25 = arith.divf %23, %24 : vector<1x128xf32>
    %cst_12 = arith.constant 9.99999974E-6 : f32
    %26 = vector.broadcast %cst_12 : f32 to vector<1x128xf32>
    %27 = arith.addf %25, %26 : vector<1x128xf32>
    %28 = math.rsqrt %27 : vector<1x128xf32>
    %29 = arith.mulf %13, %28 : vector<1x128xf32>
    %30 = arith.mulf %18, %29 : vector<1x128xf32>
    %31 = arith.subf %14, %30 : vector<1x128xf32>
    %32 = vector.broadcast %29 : vector<1x128xf32> to vector<8x128xf32>
    %33 = arith.mulf %12, %32 : vector<8x128xf32>
    %34 = vector.broadcast %31 : vector<1x128xf32> to vector<8x128xf32>
    %35 = arith.addf %33, %34 : vector<8x128xf32>
    %cst_13 = arith.constant 0.000000e+00 : f32
    %36 = vector.broadcast %cst_13 : f32 to vector<8x128xf32>
    %37 = arith.maximumf %35, %36 : vector<8x128xf32>
    %38 = arith.truncf %37 : vector<8x128xf32> to vector<8x128xbf16>
    %39 = vector.extract_strided_slice %38 {offsets = [0, 0], sizes = [8, 64], strides = [1, 1]} : vector<8x128xbf16> to vector<8x64xbf16>
    %c0_14 = arith.constant 0 : index
    %c0_15 = arith.constant 0 : index
    %40 = vector.load %arg4[%c0_14, %c0_15] : memref<64x1152xbf16, #tpu.memory_space<vmem>>, vector<64x1152xbf16>
    %cst_16 = arith.constant dense<0.000000e+00> : vector<8x1152xf32>
    %41 = tpu.matmul %39, %40, %cst_16 {dimension_numbers = #tpu.dot_dimension_numbers<[1], [0], [0], [1], [0, 0, 1, 1], [], []>} : vector<8x64xbf16>, vector<64x1152xbf16>, vector<8x1152xf32> -> vector<8x1152xf32>
    %42 = vector.extract_strided_slice %41 {offsets = [0, 0], sizes = [8, 128], strides = [1, 1]} : vector<8x1152xf32> to vector<8x128xf32>
    %43 = vector.extract_strided_slice %41 {offsets = [0, 128], sizes = [8, 128], strides = [1, 1]} : vector<8x1152xf32> to vector<8x128xf32>
    %44 = vector.extract_strided_slice %41 {offsets = [0, 256], sizes = [8, 128], strides = [1, 1]} : vector<8x1152xf32> to vector<8x128xf32>
    %45 = vector.extract_strided_slice %41 {offsets = [0, 384], sizes = [8, 128], strides = [1, 1]} : vector<8x1152xf32> to vector<8x128xf32>
    %46 = vector.extract_strided_slice %41 {offsets = [0, 512], sizes = [8, 128], strides = [1, 1]} : vector<8x1152xf32> to vector<8x128xf32>
    %47 = vector.extract_strided_slice %41 {offsets = [0, 640], sizes = [8, 128], strides = [1, 1]} : vector<8x1152xf32> to vector<8x128xf32>
    %48 = vector.extract_strided_slice %41 {offsets = [0, 768], sizes = [8, 128], strides = [1, 1]} : vector<8x1152xf32> to vector<8x128xf32>
    %49 = vector.extract_strided_slice %41 {offsets = [0, 896], sizes = [8, 128], strides = [1, 1]} : vector<8x1152xf32> to vector<8x128xf32>
    %50 = vector.extract_strided_slice %41 {offsets = [0, 1024], sizes = [8, 128], strides = [1, 1]} : vector<8x1152xf32> to vector<8x128xf32>
    %51 = tpu.concatenate %42, %43, %44, %45, %46, %47, %48, %49, %50 in 0 : vector<8x128xf32>, vector<8x128xf32>, vector<8x128xf32>, vector<8x128xf32>, vector<8x128xf32>, vector<8x128xf32>, vector<8x128xf32>, vector<8x128xf32>, vector<8x128xf32> -> vector<72x128xf32>
    %52 = arith.truncf %51 : vector<72x128xf32> to vector<72x128xbf16>
    %c0_17 = arith.constant 0 : index
    %c0_18 = arith.constant 0 : index
    %53 = vector.load %arg5[%c0_17, %c0_18] : memref<24x72xbf16, #tpu.memory_space<vmem>>, vector<24x72xbf16>
    %cst_19 = arith.constant dense<0.000000e+00> : vector<24x128xf32>
    %54 = tpu.matmul %53, %52, %cst_19 {dimension_numbers = #tpu.dot_dimension_numbers<[1], [0], [0], [1], [0, 0, 1, 1], [], []>} : vector<24x72xbf16>, vector<72x128xbf16>, vector<24x128xf32> -> vector<24x128xf32>
    %55 = vector.extract_strided_slice %0 {offsets = [2, 0], sizes = [1, 128], strides = [1, 1]} : vector<6x128xf32> to vector<1x128xf32>
    %56 = vector.extract_strided_slice %0 {offsets = [3, 0], sizes = [1, 128], strides = [1, 1]} : vector<6x128xf32> to vector<1x128xf32>
    %57 = tpu.iota {dimensions = array<i32: 0>} : vector<24x128xi32>
    %c18_i32 = arith.constant 18 : i32
    %58 = vector.broadcast %c18_i32 : i32 to vector<24x128xi32>
    %59 = arith.cmpi slt, %57, %58 : vector<24x128xi32>
    %cst_20 = arith.constant 0.000000e+00 : f32
    %60 = vector.broadcast %cst_20 : f32 to vector<24x128xf32>
    %61 = arith.select %59, %54, %60 : vector<24x128xi1>, vector<24x128xf32>
    %cst_21 = arith.constant dense<0.000000e+00> : vector<128xf32>
    %62 = vector.multi_reduction <add>, %61, %cst_21 [0] : vector<24x128xf32> to vector<128xf32>
    %63 = vector.shape_cast %62 : vector<128xf32> to vector<1x128xf32>
    %cst_22 = arith.constant 1.800000e+01 : f32
    %64 = vector.broadcast %cst_22 : f32 to vector<1x128xf32>
    %65 = arith.divf %63, %64 : vector<1x128xf32>
    %66 = vector.broadcast %65 : vector<1x128xf32> to vector<24x128xf32>
    %67 = arith.subf %54, %66 : vector<24x128xf32>
    %cst_23 = arith.constant 0.000000e+00 : f32
    %68 = vector.broadcast %cst_23 : f32 to vector<24x128xf32>
    %69 = arith.select %59, %67, %68 : vector<24x128xi1>, vector<24x128xf32>
    %70 = arith.mulf %69, %69 : vector<24x128xf32>
    %cst_24 = arith.constant dense<0.000000e+00> : vector<128xf32>
    %71 = vector.multi_reduction <add>, %70, %cst_24 [0] : vector<24x128xf32> to vector<128xf32>
    %72 = vector.shape_cast %71 : vector<128xf32> to vector<1x128xf32>
    %cst_25 = arith.constant 1.800000e+01 : f32
    %73 = vector.broadcast %cst_25 : f32 to vector<1x128xf32>
    %74 = arith.divf %72, %73 : vector<1x128xf32>
    %cst_26 = arith.constant 9.99999974E-6 : f32
    %75 = vector.broadcast %cst_26 : f32 to vector<1x128xf32>
    %76 = arith.addf %74, %75 : vector<1x128xf32>
    %77 = math.rsqrt %76 : vector<1x128xf32>
    %78 = arith.mulf %55, %77 : vector<1x128xf32>
    %79 = arith.mulf %65, %78 : vector<1x128xf32>
    %80 = arith.subf %56, %79 : vector<1x128xf32>
    %81 = vector.broadcast %78 : vector<1x128xf32> to vector<24x128xf32>
    %82 = arith.mulf %54, %81 : vector<24x128xf32>
    %83 = vector.broadcast %80 : vector<1x128xf32> to vector<24x128xf32>
    %84 = arith.addf %82, %83 : vector<24x128xf32>
    %cst_27 = arith.constant 0.000000e+00 : f32
    %85 = vector.broadcast %cst_27 : f32 to vector<24x128xf32>
    %86 = arith.maximumf %84, %85 : vector<24x128xf32>
    %cst_28 = arith.constant 0.000000e+00 : f32
    %87 = vector.broadcast %cst_28 : f32 to vector<24x128xf32>
    %88 = arith.select %59, %86, %87 : vector<24x128xi1>, vector<24x128xf32>
    %89 = arith.truncf %88 : vector<24x128xf32> to vector<24x128xbf16>
    %90 = vector.extract_strided_slice %89 {offsets = [0, 0], sizes = [24, 32], strides = [1, 1]} : vector<24x128xbf16> to vector<24x32xbf16>
    %c0_29 = arith.constant 0 : index
    %c0_30 = arith.constant 0 : index
    %91 = vector.load %arg6[%c0_29, %c0_30] : memref<32x1152xbf16, #tpu.memory_space<vmem>>, vector<32x1152xbf16>
    %cst_31 = arith.constant dense<0.000000e+00> : vector<24x1152xf32>
    %92 = tpu.matmul %90, %91, %cst_31 {dimension_numbers = #tpu.dot_dimension_numbers<[1], [0], [0], [1], [0, 0, 1, 1], [], []>} : vector<24x32xbf16>, vector<32x1152xbf16>, vector<24x1152xf32> -> vector<24x1152xf32>
    %93 = vector.extract_strided_slice %92 {offsets = [0, 0], sizes = [24, 128], strides = [1, 1]} : vector<24x1152xf32> to vector<24x128xf32>
    %94 = vector.extract_strided_slice %92 {offsets = [0, 128], sizes = [24, 128], strides = [1, 1]} : vector<24x1152xf32> to vector<24x128xf32>
    %95 = vector.extract_strided_slice %92 {offsets = [0, 256], sizes = [24, 128], strides = [1, 1]} : vector<24x1152xf32> to vector<24x128xf32>
    %96 = vector.extract_strided_slice %92 {offsets = [0, 384], sizes = [24, 128], strides = [1, 1]} : vector<24x1152xf32> to vector<24x128xf32>
    %97 = vector.extract_strided_slice %92 {offsets = [0, 512], sizes = [24, 128], strides = [1, 1]} : vector<24x1152xf32> to vector<24x128xf32>
    %98 = vector.extract_strided_slice %92 {offsets = [0, 640], sizes = [24, 128], strides = [1, 1]} : vector<24x1152xf32> to vector<24x128xf32>
    %99 = vector.extract_strided_slice %92 {offsets = [0, 768], sizes = [24, 128], strides = [1, 1]} : vector<24x1152xf32> to vector<24x128xf32>
    %100 = vector.extract_strided_slice %92 {offsets = [0, 896], sizes = [24, 128], strides = [1, 1]} : vector<24x1152xf32> to vector<24x128xf32>
    %101 = vector.extract_strided_slice %92 {offsets = [0, 1024], sizes = [24, 128], strides = [1, 1]} : vector<24x1152xf32> to vector<24x128xf32>
    %102 = tpu.concatenate %93, %94, %95, %96, %97, %98, %99, %100, %101 in 0 : vector<24x128xf32>, vector<24x128xf32>, vector<24x128xf32>, vector<24x128xf32>, vector<24x128xf32>, vector<24x128xf32>, vector<24x128xf32>, vector<24x128xf32>, vector<24x128xf32> -> vector<216x128xf32>
    %103 = arith.truncf %102 : vector<216x128xf32> to vector<216x128xbf16>
    %c0_32 = arith.constant 0 : index
    %c0_33 = arith.constant 0 : index
    %104 = vector.load %arg7[%c0_32, %c0_33] : memref<56x216xbf16, #tpu.memory_space<vmem>>, vector<56x216xbf16>
    %cst_34 = arith.constant dense<0.000000e+00> : vector<56x128xf32>
    %105 = tpu.matmul %104, %103, %cst_34 {dimension_numbers = #tpu.dot_dimension_numbers<[1], [0], [0], [1], [0, 0, 1, 1], [], []>} : vector<56x216xbf16>, vector<216x128xbf16>, vector<56x128xf32> -> vector<56x128xf32>
    %106 = vector.extract_strided_slice %0 {offsets = [4, 0], sizes = [1, 128], strides = [1, 1]} : vector<6x128xf32> to vector<1x128xf32>
    %107 = vector.extract_strided_slice %0 {offsets = [5, 0], sizes = [1, 128], strides = [1, 1]} : vector<6x128xf32> to vector<1x128xf32>
    %108 = tpu.iota {dimensions = array<i32: 0>} : vector<56x128xi32>
    %c50_i32 = arith.constant 50 : i32
    %109 = vector.broadcast %c50_i32 : i32 to vector<56x128xi32>
    %110 = arith.cmpi slt, %108, %109 : vector<56x128xi32>
    %cst_35 = arith.constant 0.000000e+00 : f32
    %111 = vector.broadcast %cst_35 : f32 to vector<56x128xf32>
    %112 = arith.select %110, %105, %111 : vector<56x128xi1>, vector<56x128xf32>
    %cst_36 = arith.constant dense<0.000000e+00> : vector<128xf32>
    %113 = vector.multi_reduction <add>, %112, %cst_36 [0] : vector<56x128xf32> to vector<128xf32>
    %114 = vector.shape_cast %113 : vector<128xf32> to vector<1x128xf32>
    %cst_37 = arith.constant 5.000000e+01 : f32
    %115 = vector.broadcast %cst_37 : f32 to vector<1x128xf32>
    %116 = arith.divf %114, %115 : vector<1x128xf32>
    %117 = vector.broadcast %116 : vector<1x128xf32> to vector<56x128xf32>
    %118 = arith.subf %105, %117 : vector<56x128xf32>
    %cst_38 = arith.constant 0.000000e+00 : f32
    %119 = vector.broadcast %cst_38 : f32 to vector<56x128xf32>
    %120 = arith.select %110, %118, %119 : vector<56x128xi1>, vector<56x128xf32>
    %121 = arith.mulf %120, %120 : vector<56x128xf32>
    %cst_39 = arith.constant dense<0.000000e+00> : vector<128xf32>
    %122 = vector.multi_reduction <add>, %121, %cst_39 [0] : vector<56x128xf32> to vector<128xf32>
    %123 = vector.shape_cast %122 : vector<128xf32> to vector<1x128xf32>
    %cst_40 = arith.constant 5.000000e+01 : f32
    %124 = vector.broadcast %cst_40 : f32 to vector<1x128xf32>
    %125 = arith.divf %123, %124 : vector<1x128xf32>
    %cst_41 = arith.constant 9.99999974E-6 : f32
    %126 = vector.broadcast %cst_41 : f32 to vector<1x128xf32>
    %127 = arith.addf %125, %126 : vector<1x128xf32>
    %128 = math.rsqrt %127 : vector<1x128xf32>
    %129 = arith.mulf %106, %128 : vector<1x128xf32>
    %130 = arith.mulf %116, %129 : vector<1x128xf32>
    %131 = arith.subf %107, %130 : vector<1x128xf32>
    %132 = vector.broadcast %129 : vector<1x128xf32> to vector<56x128xf32>
    %133 = arith.mulf %105, %132 : vector<56x128xf32>
    %134 = vector.broadcast %131 : vector<1x128xf32> to vector<56x128xf32>
    %135 = arith.addf %133, %134 : vector<56x128xf32>
    %cst_42 = arith.constant 0.000000e+00 : f32
    %136 = vector.broadcast %cst_42 : f32 to vector<56x128xf32>
    %137 = arith.maximumf %135, %136 : vector<56x128xf32>
    %cst_43 = arith.constant 0.000000e+00 : f32
    %138 = vector.broadcast %cst_43 : f32 to vector<56x128xf32>
    %139 = arith.select %110, %137, %138 : vector<56x128xi1>, vector<56x128xf32>
    %140 = arith.truncf %139 : vector<56x128xf32> to vector<56x128xbf16>
    %141 = vector.extract_strided_slice %140 {offsets = [0, 0], sizes = [56, 32], strides = [1, 1]} : vector<56x128xbf16> to vector<56x32xbf16>
    %c0_44 = arith.constant 0 : index
    %c0_45 = arith.constant 0 : index
    %142 = vector.load %arg8[%c0_44, %c0_45] : memref<32x1152xbf16, #tpu.memory_space<vmem>>, vector<32x1152xbf16>
    %cst_46 = arith.constant dense<0.000000e+00> : vector<56x1152xf32>
    %143 = tpu.matmul %141, %142, %cst_46 {dimension_numbers = #tpu.dot_dimension_numbers<[1], [0], [0], [1], [0, 0, 1, 1], [], []>} : vector<56x32xbf16>, vector<32x1152xbf16>, vector<56x1152xf32> -> vector<56x1152xf32>
    %144 = vector.extract_strided_slice %143 {offsets = [0, 0], sizes = [56, 128], strides = [1, 1]} : vector<56x1152xf32> to vector<56x128xf32>
    %145 = vector.extract_strided_slice %143 {offsets = [0, 128], sizes = [56, 128], strides = [1, 1]} : vector<56x1152xf32> to vector<56x128xf32>
    %146 = vector.extract_strided_slice %143 {offsets = [0, 256], sizes = [56, 128], strides = [1, 1]} : vector<56x1152xf32> to vector<56x128xf32>
    %147 = vector.extract_strided_slice %143 {offsets = [0, 384], sizes = [56, 128], strides = [1, 1]} : vector<56x1152xf32> to vector<56x128xf32>
    %148 = vector.extract_strided_slice %143 {offsets = [0, 512], sizes = [56, 128], strides = [1, 1]} : vector<56x1152xf32> to vector<56x128xf32>
    %149 = vector.extract_strided_slice %143 {offsets = [0, 640], sizes = [56, 128], strides = [1, 1]} : vector<56x1152xf32> to vector<56x128xf32>
    %150 = vector.extract_strided_slice %143 {offsets = [0, 768], sizes = [56, 128], strides = [1, 1]} : vector<56x1152xf32> to vector<56x128xf32>
    %151 = vector.extract_strided_slice %143 {offsets = [0, 896], sizes = [56, 128], strides = [1, 1]} : vector<56x1152xf32> to vector<56x128xf32>
    %152 = vector.extract_strided_slice %143 {offsets = [0, 1024], sizes = [56, 128], strides = [1, 1]} : vector<56x1152xf32> to vector<56x128xf32>
    %153 = tpu.concatenate %144, %145, %146, %147, %148, %149, %150, %151, %152 in 0 : vector<56x128xf32>, vector<56x128xf32>, vector<56x128xf32>, vector<56x128xf32>, vector<56x128xf32>, vector<56x128xf32>, vector<56x128xf32>, vector<56x128xf32>, vector<56x128xf32> -> vector<504x128xf32>
    %154 = arith.truncf %153 : vector<504x128xf32> to vector<504x128xbf16>
    %c0_47 = arith.constant 0 : index
    %c0_48 = arith.constant 0 : index
    %155 = vector.load %arg9[%c0_47, %c0_48] : memref<56x504xbf16, #tpu.memory_space<vmem>>, vector<56x504xbf16>
    %cst_49 = arith.constant dense<0.000000e+00> : vector<56x128xf32>
    %156 = tpu.matmul %155, %154, %cst_49 {dimension_numbers = #tpu.dot_dimension_numbers<[1], [0], [0], [1], [0, 0, 1, 1], [], []>} : vector<56x504xbf16>, vector<504x128xbf16>, vector<56x128xf32> -> vector<56x128xf32>
    %157 = math.tanh %156 : vector<56x128xf32>
    %c0_50 = arith.constant 0 : index
    %c0_51 = arith.constant 0 : index
    %158 = vector.load %arg11[%c0_50, %c0_51] : memref<56x128xf32, #tpu.memory_space<vmem>>, vector<56x128xf32>
    tpu.vector_store %arg11[%c0_50, %c0_51], %157 {strides = array<i32>} : memref<56x128xf32, #tpu.memory_space<vmem>>, vector<56x128xf32>,
    return
  }
  func.func @transform_0(%arg0: i32) -> (i32, i32) {
    %c0_i32 = arith.constant 0 : i32
    %c0_i32_0 = arith.constant 0 : i32
    %c0_i32_1 = arith.constant 0 : i32
    return %c0_i32, %c0_i32_0 : i32, i32
  }
  func.func @transform_1(%arg0: i32) -> (i32, i32) {
    %c0_i32 = arith.constant 0 : i32
    %c0_i32_0 = arith.constant 0 : i32
    %c0_i32_1 = arith.constant 0 : i32
    return %c0_i32, %c0_i32_0 : i32, i32
  }
  func.func @transform_2(%arg0: i32) -> (i32, i32) {
    %c0_i32 = arith.constant 0 : i32
    %c0_i32_0 = arith.constant 0 : i32
    %c0_i32_1 = arith.constant 0 : i32
    return %c0_i32, %c0_i32_0 : i32, i32
  }
  func.func @transform_3(%arg0: i32) -> (i32, i32) {
    %c0_i32 = arith.constant 0 : i32
    %c0_i32_0 = arith.constant 0 : i32
    %c0_i32_1 = arith.constant 0 : i32
    return %c0_i32, %c0_i32_0 : i32, i32
  }
  func.func @transform_4(%arg0: i32) -> (i32, i32) {
    %c0_i32 = arith.constant 0 : i32
    %c0_i32_0 = arith.constant 0 : i32
    %c0_i32_1 = arith.constant 0 : i32
    return %c0_i32, %c0_i32_0 : i32, i32
  }
  func.func @transform_5(%arg0: i32) -> (i32, i32) {
    %c0_i32 = arith.constant 0 : i32
    %c0_i32_0 = arith.constant 0 : i32
    %c0_i32_1 = arith.constant 0 : i32
    return %c0_i32, %c0_i32_0 : i32, i32
  }
  func.func @transform_6(%arg0: i32) -> (i32, i32) {
    %c0_i32 = arith.constant 0 : i32
    %c0_i32_0 = arith.constant 0 : i32
    %c0_i32_1 = arith.constant 0 : i32
    return %c0_i32, %c0_i32_0 : i32, i32
  }
  func.func @transform_7(%arg0: i32) -> (i32, i32) {
    %c0_i32 = arith.constant 0 : i32
    %c0_i32_0 = arith.constant 0 : i32
    %c0_i32_1 = arith.constant 0 : i32
    return %c0_i32, %c0_i32_0 : i32, i32
  }
  func.func @transform_8(%arg0: i32) -> (i32, i32) {
    %c0_i32 = arith.constant 0 : i32
    %c0_i32_0 = arith.constant 0 : i32
    %c0_i32_1 = arith.constant 0 : i32
    return %c0_i32, %c0_i32_0 : i32, i32
  }
  func.func @transform_9(%arg0: i32) -> (i32, i32) {
    %c0_i32 = arith.constant 0 : i32
    %c0_i32_0 = arith.constant 0 : i32
    %c0_i32_1 = arith.constant 0 : i32
    return %c0_i32, %c0_i32_0 : i32, i32
  }
  func.func @transform_10(%arg0: i32) -> (i32, i32) {
    %c0_i32 = arith.constant 0 : i32
    %c0_i32_0 = arith.constant 0 : i32
    %c0_i32_1 = arith.constant 0 : i32
    return %c0_i32, %c0_i32_0 : i32, i32
  }
}

</mosaic_0001>

<llo_original>
// kernel: netGv_forward.1
$region0: #{netGv_forward.1}
  #allocation0 [shape = 'u32[]', space=smem, size = 0x4, offset = 0x4, fixed_abs, tag = 'smem constant byte address 0x4 - core index']
  #allocation1 [shape = 'u32[72,128]{1,0:T(1,128)}', space=vmem, size = 0x9000, scoped, tag = 'internal scratch']
  %s0 = inlined_call_operand.vmem [shape: f32[8,100], index: 0, kind: input, shape index: {}]
  %s1 = inlined_call_operand.vmem [shape: bf16[100,512], index: 1, kind: input, shape index: {}]
  %s2 = inlined_call_operand.vmem [shape: bf16[8,32], index: 2, kind: input, shape index: {}]
  %s3 = inlined_call_operand.vmem [shape: bf16[64,1152], index: 3, kind: input, shape index: {}]
  %s4 = inlined_call_operand.vmem [shape: bf16[24,72], index: 4, kind: input, shape index: {}]
  %s5 = inlined_call_operand.vmem [shape: bf16[32,1152], index: 5, kind: input, shape index: {}]
  %s6 = inlined_call_operand.vmem [shape: bf16[56,216], index: 6, kind: input, shape index: {}]
  %s7 = inlined_call_operand.vmem [shape: bf16[32,1152], index: 7, kind: input, shape index: {}]
  %s8 = inlined_call_operand.vmem [shape: bf16[56,504], index: 8, kind: input, shape index: {}]
  %s9 = inlined_call_operand.vmem [shape: f32[6,128], index: 9, kind: input, shape index: {}]
  %s10 = inlined_call_operand.vmem [shape: f32[56,128], index: 10, kind: output, shape index: {}]
  %s11 = sld [smem:[#allocation0]]
  $region50: #{netGv_forward.1} parent=0
    _
  %s13 = ssub.s32 1, %s11
  %s14 = scalar_select 0, %s13, %s11
  // Predicated region
  $region2: #{netGv_forward.1} parent=0 // pred_check
    _
  $region3: #{netGv_forward.1} parent=0 // pred_check_branch
    %16 = sbr.rel (0) target = $region5
  $region4: #{netGv_forward.1} parent=0 // pred_region
    _
  $region5: #{netGv_forward.1} parent=0 // pred_fallthru
    _
  // Predicated region
  $region6: #{netGv_forward.1} parent=0 // pred_check
    _
  $region7: #{netGv_forward.1} parent=0 // pred_check_branch
    %18 = sbr.rel (0) target = $region9
  $region8: #{netGv_forward.1} parent=0 // pred_region
    _
  $region9: #{netGv_forward.1} parent=0 // pred_fallthru
    _
  // Predicated region
  $region10: #{netGv_forward.1} parent=0 // pred_check
    _
  $region11: #{netGv_forward.1} parent=0 // pred_check_branch
    %20 = sbr.rel (0) target = $region13
  $region12: #{netGv_forward.1} parent=0 // pred_region
    _
  $region13: #{netGv_forward.1} parent=0 // pred_fallthru
    _
  // Predicated region
  $region14: #{netGv_forward.1} parent=0 // pred_check
    _
  $region15: #{netGv_forward.1} parent=0 // pred_check_branch
    %22 = sbr.rel (0) target = $region17
  $region16: #{netGv_forward.1} parent=0 // pred_region
    _
  $region17: #{netGv_forward.1} parent=0 // pred_fallthru
    _
  // Predicated region
  $region18: #{netGv_forward.1} parent=0 // pred_check
    _
  $region19: #{netGv_forward.1} parent=0 // pred_check_branch
    %24 = sbr.rel (0) target = $region21
  $region20: #{netGv_forward.1} parent=0 // pred_region
    _
  $region21: #{netGv_forward.1} parent=0 // pred_fallthru
    _
  // Predicated region
  $region22: #{netGv_forward.1} parent=0 // pred_check
    _
  $region23: #{netGv_forward.1} parent=0 // pred_check_branch
    %26 = sbr.rel (0) target = $region25
  $region24: #{netGv_forward.1} parent=0 // pred_region
    _
  $region25: #{netGv_forward.1} parent=0 // pred_fallthru
    _
  // Predicated region
  $region26: #{netGv_forward.1} parent=0 // pred_check
    _
  $region27: #{netGv_forward.1} parent=0 // pred_check_branch
    %28 = sbr.rel (0) target = $region29
  $region28: #{netGv_forward.1} parent=0 // pred_region
    _
  $region29: #{netGv_forward.1} parent=0 // pred_fallthru
    _
  // Predicated region
  $region30: #{netGv_forward.1} parent=0 // pred_check
    _
  $region31: #{netGv_forward.1} parent=0 // pred_check_branch
    %30 = sbr.rel (0) target = $region33
  $region32: #{netGv_forward.1} parent=0 // pred_region
    _
  $region33: #{netGv_forward.1} parent=0 // pred_fallthru
    _
  // Predicated region
  $region34: #{netGv_forward.1} parent=0 // pred_check
    _
  $region35: #{netGv_forward.1} parent=0 // pred_check_branch
    %32 = sbr.rel (0) target = $region37
  $region36: #{netGv_forward.1} parent=0 // pred_region
    _
  $region37: #{netGv_forward.1} parent=0 // pred_fallthru
    _
  // Predicated region
  $region38: #{netGv_forward.1} parent=0 // pred_check
    _
  $region39: #{netGv_forward.1} parent=0 // pred_check_branch
    %34 = sbr.rel (0) target = $region41
  $region40: #{netGv_forward.1} parent=0 // pred_region
    _
  $region41: #{netGv_forward.1} parent=0 // pred_fallthru
    _
  %v36 = vld [vmem:[%s9] sm:$0x3f]
  %v37 = vld [vmem:[%s0] sm:$0xff]
  %v38 = vpack.c.bf16 %v37, %v37
  %v39 = vld [vmem:[%s1] sm:$0xff]
  %v40 = vld [vmem:[%s1 + $0x8] sm:$0xff]
  %v41 = vld [vmem:[%s1 + $0x10] sm:$0xff]
  %v42 = vld [vmem:[%s1 + $0x18] sm:$0xff]
  %v43 = vld [vmem:[%s1 + $0x20] sm:$0xff]
  %v44 = vld [vmem:[%s1 + $0x28] sm:$0xff]
  %v45 = vld [vmem:[%s1 + $0x30] sm:$0xff]
  %v46 = vld [vmem:[%s1 + $0x38] sm:$0xff]
  %v47 = vld [vmem:[%s1 + $0x40] sm:$0xff]
  %v48 = vld [vmem:[%s1 + $0x48] sm:$0xff]
  %v49 = vld [vmem:[%s1 + $0x50] sm:$0xff]
  %v50 = vld [vmem:[%s1 + $0x58] sm:$0xff]
  %v51 = vld [vmem:[%s1 + $0x60] sm:$0xff]
  %v52 = vld [vmem:[%s1 + $0x68] sm:$0xff]
  %v53 = vld [vmem:[%s1 + $0x70] sm:$0xff]
  %v54 = vld [vmem:[%s1 + $0x78] sm:$0xff]
  %v55 = vld [vmem:[%s1 + $0x80] sm:$0xff]
  %v56 = vld [vmem:[%s1 + $0x88] sm:$0xff]
  %v57 = vld [vmem:[%s1 + $0x90] sm:$0xff]
  %v58 = vld [vmem:[%s1 + $0x98] sm:$0xff]
  %v59 = vld [vmem:[%s1 + $0xa0] sm:$0xff]
  %v60 = vld [vmem:[%s1 + $0xa8] sm:$0xff]
  %v61 = vld [vmem:[%s1 + $0xb0] sm:$0xff]
  %v62 = vld [vmem:[%s1 + $0xb8] sm:$0xff]
  %v63 = vld [vmem:[%s1 + $0xc0] sm:$0x33]
  %v64 = vld [vmem:[%s1 + $0xc8] sm:$0x33]
  %v91 = vunpack.c.l.b16 %v39
  %v92 = vunpack.c.h.b16 %v39
  %v93 = vunpack.c.l.b16 %v40
  %v94 = vunpack.c.h.b16 %v40
  %v95 = vunpack.c.l.b16 %v41
  %v96 = vunpack.c.h.b16 %v41
  %v97 = vunpack.c.l.b16 %v42
  %v98 = vunpack.c.h.b16 %v42
  %v99 = vunpack.c.l.b16 %v43
  %v100 = vunpack.c.h.b16 %v43
  %v101 = vunpack.c.l.b16 %v44
  %v102 = vunpack.c.h.b16 %v44
  %v103 = vunpack.c.l.b16 %v45
  %v104 = vunpack.c.h.b16 %v45
  %v105 = vunpack.c.l.b16 %v46
  %v106 = vunpack.c.h.b16 %v46
  %v107 = vunpack.c.l.b16 %v47
  %v108 = vunpack.c.h.b16 %v47
  %v109 = vunpack.c.l.b16 %v48
  %v110 = vunpack.c.h.b16 %v48
  %v111 = vunpack.c.l.b16 %v49
  %v112 = vunpack.c.h.b16 %v49
  %v113 = vunpack.c.l.b16 %v50
  %v114 = vunpack.c.h.b16 %v50
  %v115 = vunpack.c.l.b16 %v51
  %v116 = vunpack.c.h.b16 %v51
  %v117 = vunpack.c.l.b16 %v52
  %v118 = vunpack.c.h.b16 %v52
  %v119 = vunpack.c.l.b16 %v53
  %v120 = vunpack.c.h.b16 %v53
  %v121 = vunpack.c.l.b16 %v54
  %v122 = vunpack.c.h.b16 %v54
  %v123 = vunpack.c.l.b16 %v55
  %v124 = vunpack.c.h.b16 %v55
  %v125 = vunpack.c.l.b16 %v56
  %v126 = vunpack.c.h.b16 %v56
  %v127 = vunpack.c.l.b16 %v57
  %v128 = vunpack.c.h.b16 %v57
  %v129 = vunpack.c.l.b16 %v58
  %v130 = vunpack.c.h.b16 %v58
  %v131 = vunpack.c.l.b16 %v59
  %v132 = vunpack.c.h.b16 %v59
  %v133 = vunpack.c.l.b16 %v60
  %v134 = vunpack.c.h.b16 %v60
  %v135 = vunpack.c.l.b16 %v61
  %v136 = vunpack.c.h.b16 %v61
  %v137 = vunpack.c.l.b16 %v62
  %v138 = vunpack.c.h.b16 %v62
  %v139 = vunpack.c.l.b16 %v63
  %v140 = vunpack.c.h.b16 %v63
  %v141 = vunpack.c.l.b16 %v64
  %v142 = vunpack.c.h.b16 %v64
  %v143 = vpack.c.b16 %v95, %v91
  %v144 = vpack.c.b16 %v96, %v92
  %v145 = vpack.c.b16 %v97, %v93
  %v146 = vpack.c.b16 %v98, %v94
  %v147 = vpack.c.b16 %v103, %v99
  %v148 = vpack.c.b16 %v104, %v100
  %v149 = vpack.c.b16 %v105, %v101
  %v150 = vpack.c.b16 %v106, %v102
  %v151 = vpack.c.b16 %v111, %v107
  %v152 = vpack.c.b16 %v112, %v108
  %v153 = vpack.c.b16 %v113, %v109
  %v154 = vpack.c.b16 %v114, %v110
  %v155 = vpack.c.b16 %v119, %v115
  %v156 = vpack.c.b16 %v120, %v116
  %v157 = vpack.c.b16 %v121, %v117
  %v158 = vpack.c.b16 %v122, %v118
  %v159 = vpack.c.b16 %v127, %v123
  %v160 = vpack.c.b16 %v128, %v124
  %v161 = vpack.c.b16 %v129, %v125
  %v162 = vpack.c.b16 %v130, %v126
  %v163 = vpack.c.b16 %v135, %v131
  %v164 = vpack.c.b16 %v136, %v132
  %v165 = vpack.c.b16 %v137, %v133
  %v166 = vpack.c.b16 %v138, %v134
  %v167 = vpack.c.b16 %v139, %v139
  %v168 = vpack.c.b16 %v140, %v140
  %v169 = vpack.c.b16 %v141, %v141
  %v170 = vpack.c.b16 %v142, %v142
  %vm195 = vcmask 818176
  %v197 = vsel %vm195, %v38, 0
  %vm199 = vcmask 1041408
  %v201 = vsel %vm199, %v167, 0
  %v204 = vsel %vm199, %v168, 0
  %v207 = vsel %vm199, %v169, 0
  %v210 = vsel %vm199, %v170, 0
  %212 = vmatpush.bf16.msra.mxu0 0
  %213 = vmatpush.bf16.msra.mxu0 %v201
  %214 = vmatpush.bf16.msra.mxu0 %v163
  %215 = vmatpush.bf16.msra.mxu0 %v159
  %216 = vmatpush.bf16.msra.mxu0 %v155
  %217 = vmatpush.bf16.msra.mxu0 %v151
  %218 = vmatpush.bf16.msra.mxu0 %v147
  %219 = vmatpush.bf16.msra.mxu0 %v143
  %220 = vmatmul.bf16.gmra.mxu0 %v197
  %v221 = vpop.f32.mrf.mxu0
  %v222 = vadd.f32 0.0, %v221
  %v223 = vpop.f32.mrf.mxu0
  %224 = vdwg.mxu0
  %225 = vmatpush.bf16.msra.mxu0 0
  %226 = vmatpush.bf16.msra.mxu0 %v204
  %227 = vmatpush.bf16.msra.mxu0 %v164
  %228 = vmatpush.bf16.msra.mxu0 %v160
  %229 = vmatpush.bf16.msra.mxu0 %v156
  %230 = vmatpush.bf16.msra.mxu0 %v152
  %231 = vmatpush.bf16.msra.mxu0 %v148
  %232 = vmatpush.bf16.msra.mxu0 %v144
  %233 = vmatmul.bf16.gmra.mxu0 %v197
  %v234 = vpop.f32.mrf.mxu0
  %v235 = vadd.f32 0.0, %v234
  %v236 = vpop.f32.mrf.mxu0
  %237 = vdwg.mxu0
  %238 = vmatpush.bf16.msra.mxu0 0
  %239 = vmatpush.bf16.msra.mxu0 %v207
  %240 = vmatpush.bf16.msra.mxu0 %v165
  %241 = vmatpush.bf16.msra.mxu0 %v161
  %242 = vmatpush.bf16.msra.mxu0 %v157
  %243 = vmatpush.bf16.msra.mxu0 %v153
  %244 = vmatpush.bf16.msra.mxu0 %v149
  %245 = vmatpush.bf16.msra.mxu0 %v145
  %246 = vmatmul.bf16.gmra.mxu0 %v197
  %v247 = vpop.f32.mrf.mxu0
  %v248 = vadd.f32 0.0, %v247
  %v249 = vpop.f32.mrf.mxu0
  %250 = vdwg.mxu0
  %251 = vmatpush.bf16.msra.mxu0 0
  %252 = vmatpush.bf16.msra.mxu0 %v210
  %253 = vmatpush.bf16.msra.mxu0 %v166
  %254 = vmatpush.bf16.msra.mxu0 %v162
  %255 = vmatpush.bf16.msra.mxu0 %v158
  %256 = vmatpush.bf16.msra.mxu0 %v154
  %257 = vmatpush.bf16.msra.mxu0 %v150
  %258 = vmatpush.bf16.msra.mxu0 %v146
  %259 = vmatmul.bf16.gmra.mxu0 %v197
  %v260 = vpop.f32.mrf.mxu0
  %v261 = vadd.f32 0.0, %v260
  %v262 = vpop.f32.mrf.mxu0
  %263 = vdwg.mxu0
  %v264 = vpack.c.bf16 %v235, %v222
  %v265 = vpack.c.bf16 %v261, %v248
  %v266 = vld [vmem:[%s2] sm:$0xf]
  %vm267 = vcmask 261120
  %v269 = vsel %vm267, %v266, 0
  %271 = vmatpush.bf16.msra.mxu0 0
  %272 = vmatpush.bf16.msra.mxu0 0
  %273 = vmatpush.bf16.msra.mxu0 0
  %274 = vmatpush.bf16.msra.mxu0 0
  %275 = vmatpush.bf16.msra.mxu0 0
  %276 = vmatpush.bf16.msra.mxu0 0
  %277 = vmatpush.bf16.msra.mxu0 %v265
  %278 = vmatpush.bf16.msra.mxu0 %v264
  %279 = vmatmul.bf16.gmra.mxu0 %v269
  %v280 = vpop.f32.mrf.mxu0
  %v281 = vadd.f32 0.0, %v280
  %v282 = vpop.f32.mrf.mxu0
  %283 = vdwg.mxu0
  %v284 = vrot.slane %v281, 4
  %v285 = vadd.f32 %v281, %v284
  %v286 = vrot.slane %v285, 2
  %v287 = vadd.f32 %v285, %v286
  %v288 = vrot.slane %v287, 1
  %v289 = vadd.f32 %v287, %v288
  %v290 = vrcp.pop 8.0
  %v291 = vmul.f32 8.0, %v290
  %v292 = vsub.f32 1.0, %v291
  %v293 = vmul.f32 %v290, %v292
  %v294 = vadd.f32 %v290, %v293
  %vm295 = vweird.f32 %v290
  %v296 = vsel %vm295, %v290, %v294
  %v297 = vmul.f32 %v289, %v296
  %v298 = vsub.f32 %v281, %v297
  %v299 = vmul.f32 %v298, %v298
  %v300 = vrot.slane %v299, 4
  %v301 = vadd.f32 %v299, %v300
  %v302 = vrot.slane %v301, 2
  %v303 = vadd.f32 %v301, %v302
  %v304 = vrot.slane %v303, 1
  %v305 = vadd.f32 %v303, %v304
  %v306 = vmul.f32 %v305, %v296
  %v307 = vadd.f32 %v306, 1e-05
  %v308 = vrsqrt.pop %v307
  %v309 = vmul.f32 %v308, %v307
  %v310 = vmul.f32 %v309, %v308
  %v311 = vmul.f32 0.5, %v310
  %v312 = vsub.f32 1.5, %v311
  %v313 = vmul.f32 %v308, %v312
  %vm314 = vweird.f32 %v307
  %vm315 = vweird.f32 %v308
  %vm316 = vmor %vm314, %vm315
  %v317 = vsel %vm316, %v308, %v313
  %v318 = vmul.f32 %v36, %v317
  %v319 = vmul.f32 %v297, %v318
  %v321 = vrot.slane %v319, 7
  %v323 = vsub.f32 %v36, %v321
  %v324 = vperm.slane %v318, 0
  %v325 = vmul.f32 %v281, %v324
  %v326 = vperm.slane %v323, 1
  %v327 = vadd.f32 %v325, %v326
  %v328 = vmax.f32 %v327, 0.0
  %v329 = vpack.c.bf16 %v328, %v328
  %v330 = vld [vmem:[%s3] sm:$0xff]
  %v331 = vld [vmem:[%s3 + $0x8] sm:$0xff]
  %v332 = vld [vmem:[%s3 + $0x10] sm:$0xff]
  %v333 = vld [vmem:[%s3 + $0x18] sm:$0xff]
  %v334 = vld [vmem:[%s3 + $0x20] sm:$0xf]
  %v335 = vld [vmem:[%s3 + $0x24] sm:$0xff]
  %v336 = vld [vmem:[%s3 + $0x2c] sm:$0xff]
  %v337 = vld [vmem:[%s3 + $0x34] sm:$0xff]
  %v338 = vld [vmem:[%s3 + $0x3c] sm:$0xff]
  %v339 = vld [vmem:[%s3 + $0x44] sm:$0xf]
  %v340 = vld [vmem:[%s3 + $0x48] sm:$0xff]
  %v341 = vld [vmem:[%s3 + $0x50] sm:$0xff]
  %v342 = vld [vmem:[%s3 + $0x58] sm:$0xff]
  %v343 = vld [vmem:[%s3 + $0x60] sm:$0xff]
  %v344 = vld [vmem:[%s3 + $0x68] sm:$0xf]
  %v345 = vld [vmem:[%s3 + $0x6c] sm:$0xff]
  %v346 = vld [vmem:[%s3 + $0x74] sm:$0xff]
  %v347 = vld [vmem:[%s3 + $0x7c] sm:$0xff]
  %v348 = vld [vmem:[%s3 + $0x84] sm:$0xff]
  %v349 = vld [vmem:[%s3 + $0x8c] sm:$0xf]
  %v350 = vld [vmem:[%s3 + $0x90] sm:$0xff]
  %v351 = vld [vmem:[%s3 + $0x98] sm:$0xff]
  %v352 = vld [vmem:[%s3 + $0xa0] sm:$0xff]
  %v353 = vld [vmem:[%s3 + $0xa8] sm:$0xff]
  %v354 = vld [vmem:[%s3 + $0xb0] sm:$0xf]
  %v355 = vld [vmem:[%s3 + $0xb4] sm:$0xff]
  %v356 = vld [vmem:[%s3 + $0xbc] sm:$0xff]
  %v357 = vld [vmem:[%s3 + $0xc4] sm:$0xff]
  %v358 = vld [vmem:[%s3 + $0xcc] sm:$0xff]
  %v359 = vld [vmem:[%s3 + $0xd4] sm:$0xf]
  %v360 = vld [vmem:[%s3 + $0xd8] sm:$0xff]
  %v361 = vld [vmem:[%s3 + $0xe0] sm:$0xff]
  %v362 = vld [vmem:[%s3 + $0xe8] sm:$0xff]
  %v363 = vld [vmem:[%s3 + $0xf0] sm:$0xff]
  %v364 = vld [vmem:[%s3 + $0xf8] sm:$0xf]
  %v365 = vld [vmem:[%s3 + $0xfc] sm:$0xff]
  %v366 = vld [vmem:[%s3 + $0x104] sm:$0xff]
  %v367 = vld [vmem:[%s3 + $0x10c] sm:$0xff]
  %v368 = vld [vmem:[%s3 + $0x114] sm:$0xff]
  %v369 = vld [vmem:[%s3 + $0x11c] sm:$0xf]
  %v410 = vunpack.c.l.b16 %v330
  %v411 = vunpack.c.h.b16 %v330
  %v412 = vunpack.c.l.b16 %v331
  %v413 = vunpack.c.h.b16 %v331
  %v414 = vunpack.c.l.b16 %v332
  %v415 = vunpack.c.h.b16 %v332
  %v416 = vunpack.c.l.b16 %v333
  %v417 = vunpack.c.h.b16 %v333
  %v418 = vunpack.c.l.b16 %v334
  %v419 = vunpack.c.l.b16 %v335
  %v420 = vunpack.c.h.b16 %v335
  %v421 = vunpack.c.l.b16 %v336
  %v422 = vunpack.c.h.b16 %v336
  %v423 = vunpack.c.l.b16 %v337
  %v424 = vunpack.c.h.b16 %v337
  %v425 = vunpack.c.l.b16 %v338
  %v426 = vunpack.c.h.b16 %v338
  %v427 = vunpack.c.l.b16 %v339
  %v428 = vunpack.c.l.b16 %v340
  %v429 = vunpack.c.h.b16 %v340
  %v430 = vunpack.c.l.b16 %v341
  %v431 = vunpack.c.h.b16 %v341
  %v432 = vunpack.c.l.b16 %v342
  %v433 = vunpack.c.h.b16 %v342
  %v434 = vunpack.c.l.b16 %v343
  %v435 = vunpack.c.h.b16 %v343
  %v436 = vunpack.c.l.b16 %v344
  %v437 = vunpack.c.l.b16 %v345
  %v438 = vunpack.c.h.b16 %v345
  %v439 = vunpack.c.l.b16 %v346
  %v440 = vunpack.c.h.b16 %v346
  %v441 = vunpack.c.l.b16 %v347
  %v442 = vunpack.c.h.b16 %v347
  %v443 = vunpack.c.l.b16 %v348
  %v444 = vunpack.c.h.b16 %v348
  %v445 = vunpack.c.l.b16 %v349
  %v446 = vunpack.c.l.b16 %v350
  %v447 = vunpack.c.h.b16 %v350
  %v448 = vunpack.c.l.b16 %v351
  %v449 = vunpack.c.h.b16 %v351
  %v450 = vunpack.c.l.b16 %v352
  %v451 = vunpack.c.h.b16 %v352
  %v452 = vunpack.c.l.b16 %v353
  %v453 = vunpack.c.h.b16 %v353
  %v454 = vunpack.c.l.b16 %v354
  %v455 = vunpack.c.l.b16 %v355
  %v456 = vunpack.c.h.b16 %v355
  %v457 = vunpack.c.l.b16 %v356
  %v458 = vunpack.c.h.b16 %v356
  %v459 = vunpack.c.l.b16 %v357
  %v460 = vunpack.c.h.b16 %v357
  %v461 = vunpack.c.l.b16 %v358
  %v462 = vunpack.c.h.b16 %v358
  %v463 = vunpack.c.l.b16 %v359
  %v464 = vunpack.c.l.b16 %v360
  %v465 = vunpack.c.h.b16 %v360
  %v466 = vunpack.c.l.b16 %v361
  %v467 = vunpack.c.h.b16 %v361
  %v468 = vunpack.c.l.b16 %v362
  %v469 = vunpack.c.h.b16 %v362
  %v470 = vunpack.c.l.b16 %v363
  %v471 = vunpack.c.h.b16 %v363
  %v472 = vunpack.c.l.b16 %v364
  %v473 = vunpack.c.l.b16 %v365
  %v474 = vunpack.c.h.b16 %v365
  %v475 = vunpack.c.l.b16 %v366
  %v476 = vunpack.c.h.b16 %v366
  %v477 = vunpack.c.l.b16 %v367
  %v478 = vunpack.c.h.b16 %v367
  %v479 = vunpack.c.l.b16 %v368
  %v480 = vunpack.c.h.b16 %v368
  %v481 = vunpack.c.l.b16 %v369
  %v482 = vpack.c.b16 %v419, %v410
  %v483 = vpack.c.b16 %v420, %v411
  %v484 = vpack.c.b16 %v421, %v412
  %v485 = vpack.c.b16 %v422, %v413
  %v486 = vpack.c.b16 %v423, %v414
  %v487 = vpack.c.b16 %v424, %v415
  %v488 = vpack.c.b16 %v425, %v416
  %v489 = vpack.c.b16 %v426, %v417
  %v490 = vpack.c.b16 %v427, %v418
  %v491 = vpack.c.b16 %v437, %v428
  %v492 = vpack.c.b16 %v438, %v429
  %v493 = vpack.c.b16 %v439, %v430
  %v494 = vpack.c.b16 %v440, %v431
  %v495 = vpack.c.b16 %v441, %v432
  %v496 = vpack.c.b16 %v442, %v433
  %v497 = vpack.c.b16 %v443, %v434
  %v498 = vpack.c.b16 %v444, %v435
  %v499 = vpack.c.b16 %v445, %v436
  %v500 = vpack.c.b16 %v455, %v446
  %v501 = vpack.c.b16 %v456, %v447
  %v502 = vpack.c.b16 %v457, %v448
  %v503 = vpack.c.b16 %v458, %v449
  %v504 = vpack.c.b16 %v459, %v450
  %v505 = vpack.c.b16 %v460, %v451
  %v506 = vpack.c.b16 %v461, %v452
  %v507 = vpack.c.b16 %v462, %v453
  %v508 = vpack.c.b16 %v463, %v454
  %v509 = vpack.c.b16 %v473, %v464
  %v510 = vpack.c.b16 %v474, %v465
  %v511 = vpack.c.b16 %v475, %v466
  %v512 = vpack.c.b16 %v476, %v467
  %v513 = vpack.c.b16 %v477, %v468
  %v514 = vpack.c.b16 %v478, %v469
  %v515 = vpack.c.b16 %v479, %v470
  %v516 = vpack.c.b16 %v480, %v471
  %v517 = vpack.c.b16 %v481, %v472
  %vm554 = vcmask 523264
  %v556 = vsel %vm554, %v329, 0
  %558 = vmatpush.bf16.msra.mxu0 0
  %559 = vmatpush.bf16.msra.mxu0 0
  %560 = vmatpush.bf16.msra.mxu0 0
  %561 = vmatpush.bf16.msra.mxu0 0
  %562 = vmatpush.bf16.msra.mxu0 %v509
  %563 = vmatpush.bf16.msra.mxu0 %v500
  %564 = vmatpush.bf16.msra.mxu0 %v491
  %565 = vmatpush.bf16.msra.mxu0 %v482
  %566 = vmatmul.bf16.gmra.mxu0 %v556
  %v567 = vpop.f32.mrf.mxu0
  %v568 = vadd.f32 0.0, %v567
  %v569 = vpop.f32.mrf.mxu0
  %570 = vdwg.mxu0
  %571 = vmatpush.bf16.msra.mxu0 0
  %572 = vmatpush.bf16.msra.mxu0 0
  %573 = vmatpush.bf16.msra.mxu0 0
  %574 = vmatpush.bf16.msra.mxu0 0
  %575 = vmatpush.bf16.msra.mxu0 %v510
  %576 = vmatpush.bf16.msra.mxu0 %v501
  %577 = vmatpush.bf16.msra.mxu0 %v492
  %578 = vmatpush.bf16.msra.mxu0 %v483
  %579 = vmatmul.bf16.gmra.mxu0 %v556
  %v580 = vpop.f32.mrf.mxu0
  %v581 = vadd.f32 0.0, %v580
  %v582 = vpop.f32.mrf.mxu0
  %583 = vdwg.mxu0
  %584 = vmatpush.bf16.msra.mxu0 0
  %585 = vmatpush.bf16.msra.mxu0 0
  %586 = vmatpush.bf16.msra.mxu0 0
  %587 = vmatpush.bf16.msra.mxu0 0
  %588 = vmatpush.bf16.msra.mxu0 %v511
  %589 = vmatpush.bf16.msra.mxu0 %v502
  %590 = vmatpush.bf16.msra.mxu0 %v493
  %591 = vmatpush.bf16.msra.mxu0 %v484
  %592 = vmatmul.bf16.gmra.mxu0 %v556
  %v593 = vpop.f32.mrf.mxu0
  %v594 = vadd.f32 0.0, %v593
  %v595 = vpop.f32.mrf.mxu0
  %596 = vdwg.mxu0
  %597 = vmatpush.bf16.msra.mxu0 0
  %598 = vmatpush.bf16.msra.mxu0 0
  %599 = vmatpush.bf16.msra.mxu0 0
  %600 = vmatpush.bf16.msra.mxu0 0
  %601 = vmatpush.bf16.msra.mxu0 %v512
  %602 = vmatpush.bf16.msra.mxu0 %v503
  %603 = vmatpush.bf16.msra.mxu0 %v494
  %604 = vmatpush.bf16.msra.mxu0 %v485
  %605 = vmatmul.bf16.gmra.mxu0 %v556
  %v606 = vpop.f32.mrf.mxu0
  %v607 = vadd.f32 0.0, %v606
  %v608 = vpop.f32.mrf.mxu0
  %609 = vdwg.mxu0
  %610 = vmatpush.bf16.msra.mxu0 0
  %611 = vmatpush.bf16.msra.mxu0 0
  %612 = vmatpush.bf16.msra.mxu0 0
  %613 = vmatpush.bf16.msra.mxu0 0
  %614 = vmatpush.bf16.msra.mxu0 %v513
  %615 = vmatpush.bf16.msra.mxu0 %v504
  %616 = vmatpush.bf16.msra.mxu0 %v495
  %617 = vmatpush.bf16.msra.mxu0 %v486
  %618 = vmatmul.bf16.gmra.mxu0 %v556
  %v619 = vpop.f32.mrf.mxu0
  %v620 = vadd.f32 0.0, %v619
  %v621 = vpop.f32.mrf.mxu0
  %622 = vdwg.mxu0
  %623 = vmatpush.bf16.msra.mxu0 0
  %624 = vmatpush.bf16.msra.mxu0 0
  %625 = vmatpush.bf16.msra.mxu0 0
  %626 = vmatpush.bf16.msra.mxu0 0
  %627 = vmatpush.bf16.msra.mxu0 %v514
  %628 = vmatpush.bf16.msra.mxu0 %v505
  %629 = vmatpush.bf16.msra.mxu0 %v496
  %630 = vmatpush.bf16.msra.mxu0 %v487
  %631 = vmatmul.bf16.gmra.mxu0 %v556
  %v632 = vpop.f32.mrf.mxu0
  %v633 = vadd.f32 0.0, %v632
  %v634 = vpop.f32.mrf.mxu0
  %635 = vdwg.mxu0
  %636 = vmatpush.bf16.msra.mxu0 0
  %637 = vmatpush.bf16.msra.mxu0 0
  %638 = vmatpush.bf16.msra.mxu0 0
  %639 = vmatpush.bf16.msra.mxu0 0
  %640 = vmatpush.bf16.msra.mxu0 %v515
  %641 = vmatpush.bf16.msra.mxu0 %v506
  %642 = vmatpush.bf16.msra.mxu0 %v497
  %643 = vmatpush.bf16.msra.mxu0 %v488
  %644 = vmatmul.bf16.gmra.mxu0 %v556
  %v645 = vpop.f32.mrf.mxu0
  %v646 = vadd.f32 0.0, %v645
  %v647 = vpop.f32.mrf.mxu0
  %648 = vdwg.mxu0
  %649 = vmatpush.bf16.msra.mxu0 0
  %650 = vmatpush.bf16.msra.mxu0 0
  %651 = vmatpush.bf16.msra.mxu0 0
  %652 = vmatpush.bf16.msra.mxu0 0
  %653 = vmatpush.bf16.msra.mxu0 %v516
  %654 = vmatpush.bf16.msra.mxu0 %v507
  %655 = vmatpush.bf16.msra.mxu0 %v498
  %656 = vmatpush.bf16.msra.mxu0 %v489
  %657 = vmatmul.bf16.gmra.mxu0 %v556
  %v658 = vpop.f32.mrf.mxu0
  %v659 = vadd.f32 0.0, %v658
  %v660 = vpop.f32.mrf.mxu0
  %661 = vdwg.mxu0
  %662 = vmatpush.bf16.msra.mxu0 0
  %663 = vmatpush.bf16.msra.mxu0 0
  %664 = vmatpush.bf16.msra.mxu0 0
  %665 = vmatpush.bf16.msra.mxu0 0
  %666 = vmatpush.bf16.msra.mxu0 %v517
  %667 = vmatpush.bf16.msra.mxu0 %v508
  %668 = vmatpush.bf16.msra.mxu0 %v499
  %669 = vmatpush.bf16.msra.mxu0 %v490
  %670 = vmatmul.bf16.gmra.mxu0 %v556
  %v671 = vpop.f32.mrf.mxu0
  %v672 = vadd.f32 0.0, %v671
  %v673 = vpop.f32.mrf.mxu0
  %674 = vdwg.mxu0
  %v675 = vpack.c.bf16 %v581, %v568
  %v676 = vpack.c.bf16 %v607, %v594
  %v677 = vpack.c.bf16 %v633, %v620
  %v678 = vpack.c.bf16 %v659, %v646
  %v679 = vpack.c.bf16 %v672, %v672
  %v680 = vld [vmem:[%s4] sm:$0xf]
  %v681 = vld [vmem:[%s4 + $0x4] sm:$0xf]
  %v682 = vld [vmem:[%s4 + $0x8] sm:$0xf]
  %v686 = vunpack.c.l.b16 %v680
  %v687 = vunpack.c.l.b16 %v681
  %v688 = vunpack.c.l.b16 %v682
  %v689 = vpack.c.b16 %v687, %v686
  %v690 = vpack.c.b16 %v688, %v688
  %vm691 = vcmask 588800
  %v693 = vsel %vm691, %v689, 0
  %v696 = vsel %vm691, %v690, 0
  %vm698 = vcmask 1043456
  %v700 = vsel %vm698, %v679, 0
  %702 = vmatpush.bf16.msra.mxu0 0
  %703 = vmatpush.bf16.msra.mxu0 0
  %704 = vmatpush.bf16.msra.mxu0 0
  %705 = vmatpush.bf16.msra.mxu0 %v700
  %706 = vmatpush.bf16.msra.mxu0 %v678
  %707 = vmatpush.bf16.msra.mxu0 %v677
  %708 = vmatpush.bf16.msra.mxu0 %v676
  %709 = vmatpush.bf16.msra.mxu0 %v675
  %710 = vmatmul.bf16.gmra.mxu0 %v693
  %v711 = vpop.f32.mrf.mxu0
  %v712 = vadd.f32 0.0, %v711
  %v713 = vpop.f32.mrf.mxu0
  %v714 = vadd.f32 0.0, %v713
  %715 = vmatmul.bf16.gmra.mxu0 %v696
  %v716 = vpop.f32.mrf.mxu0
  %v717 = vadd.f32 0.0, %v716
  %v718 = vpop.f32.mrf.mxu0
  %719 = vdwg.mxu0
  %v720 = vlaneseq
  %v721 = vshrl.u32 %v720, 7
  %v722 = vadd.s32 %v721, 8
  %v723 = vadd.s32 %v721, 16
  %vm724 = vcmp.lt.s32.totalorder %v721, 18
  %vm725 = vcmp.lt.s32.totalorder %v722, 18
  %vm726 = vcmp.lt.s32.totalorder %v723, 18
  %v727 = vsel %vm724, %v712, 0.0
  %v728 = vsel %vm725, %v714, 0.0
  %v729 = vsel %vm726, %v717, 0.0
  %v730 = vadd.f32 %v727, %v728
  %v731 = vadd.f32 %v730, %v729
  %v732 = vrot.slane %v731, 4
  %v733 = vadd.f32 %v731, %v732
  %v734 = vrot.slane %v733, 2
  %v735 = vadd.f32 %v733, %v734
  %v736 = vrot.slane %v735, 1
  %v737 = vadd.f32 %v735, %v736
  %v738 = vrcp.pop 18.0
  %v739 = vmul.f32 18.0, %v738
  %v740 = vsub.f32 1.0, %v739
  %v741 = vmul.f32 %v738, %v740
  %v742 = vadd.f32 %v738, %v741
  %vm743 = vweird.f32 %v738
  %v744 = vsel %vm743, %v738, %v742
  %v745 = vmul.f32 %v737, %v744
  %v746 = vsub.f32 %v712, %v745
  %v747 = vsub.f32 %v714, %v745
  %v748 = vsub.f32 %v717, %v745
  %v749 = vsel %vm724, %v746, 0.0
  %v750 = vsel %vm725, %v747, 0.0
  %v751 = vsel %vm726, %v748, 0.0
  %v752 = vmul.f32 %v749, %v749
  %v753 = vmul.f32 %v750, %v750
  %v754 = vmul.f32 %v751, %v751
  %v755 = vadd.f32 %v752, %v753
  %v756 = vadd.f32 %v755, %v754
  %v757 = vrot.slane %v756, 4
  %v758 = vadd.f32 %v756, %v757
  %v759 = vrot.slane %v758, 2
  %v760 = vadd.f32 %v758, %v759
  %v761 = vrot.slane %v760, 1
  %v762 = vadd.f32 %v760, %v761
  %v763 = vmul.f32 %v762, %v744
  %v764 = vadd.f32 %v763, 1e-05
  %v765 = vrsqrt.pop %v764
  %v766 = vmul.f32 %v765, %v764
  %v767 = vmul.f32 %v766, %v765
  %v768 = vmul.f32 0.5, %v767
  %v769 = vsub.f32 1.5, %v768
  %v770 = vmul.f32 %v765, %v769
  %vm771 = vweird.f32 %v764
  %vm772 = vweird.f32 %v765
  %vm773 = vmor %vm771, %vm772
  %v774 = vsel %vm773, %v765, %v770
  %v775 = vmul.f32 %v36, %v774
  %v776 = vmul.f32 %v745, %v775
  %v778 = vrot.slane %v776, 7
  %v780 = vsub.f32 %v36, %v778
  %v781 = vperm.slane %v775, 2
  %v782 = vmul.f32 %v712, %v781
  %v783 = vmul.f32 %v714, %v781
  %v784 = vmul.f32 %v717, %v781
  %v785 = vperm.slane %v780, 3
  %v786 = vadd.f32 %v782, %v785
  %v787 = vadd.f32 %v783, %v785
  %v788 = vadd.f32 %v784, %v785
  %v789 = vmax.f32 %v786, 0.0
  %v790 = vmax.f32 %v787, 0.0
  %v791 = vmax.f32 %v788, 0.0
  %v792 = vsel %vm724, %v789, 0.0
  %v793 = vsel %vm725, %v790, 0.0
  %v794 = vsel %vm726, %v791, 0.0
  %v795 = vpack.c.bf16 %v792, %v792
  %v796 = vpack.c.bf16 %v793, %v793
  %v797 = vpack.c.bf16 %v794, %v794
  %v798 = vld [vmem:[%s5] sm:$0xff]
  %v799 = vld [vmem:[%s5 + $0x8] sm:$0xff]
  %v800 = vld [vmem:[%s5 + $0x10] sm:$0xff]
  %v801 = vld [vmem:[%s5 + $0x18] sm:$0xff]
  %v802 = vld [vmem:[%s5 + $0x20] sm:$0xf]
  %v803 = vld [vmem:[%s5 + $0x24] sm:$0xff]
  %v804 = vld [vmem:[%s5 + $0x2c] sm:$0xff]
  %v805 = vld [vmem:[%s5 + $0x34] sm:$0xff]
  %v806 = vld [vmem:[%s5 + $0x3c] sm:$0xff]
  %v807 = vld [vmem:[%s5 + $0x44] sm:$0xf]
  %v808 = vld [vmem:[%s5 + $0x48] sm:$0xff]
  %v809 = vld [vmem:[%s5 + $0x50] sm:$0xff]
  %v810 = vld [vmem:[%s5 + $0x58] sm:$0xff]
  %v811 = vld [vmem:[%s5 + $0x60] sm:$0xff]
  %v812 = vld [vmem:[%s5 + $0x68] sm:$0xf]
  %v813 = vld [vmem:[%s5 + $0x6c] sm:$0xff]
  %v814 = vld [vmem:[%s5 + $0x74] sm:$0xff]
  %v815 = vld [vmem:[%s5 + $0x7c] sm:$0xff]
  %v816 = vld [vmem:[%s5 + $0x84] sm:$0xff]
  %v817 = vld [vmem:[%s5 + $0x8c] sm:$0xf]
  %v821 = vunpack.c.l.b16 %v795
  %v822 = vunpack.c.l.b16 %v796
  %v823 = vunpack.c.l.b16 %v797
  %v824 = vpack.c.b16 %v822, %v821
  %v825 = vpack.c.b16 %v823, %v823
  %v846 = vunpack.c.l.b16 %v798
  %v847 = vunpack.c.h.b16 %v798
  %v848 = vunpack.c.l.b16 %v799
  %v849 = vunpack.c.h.b16 %v799
  %v850 = vunpack.c.l.b16 %v800
  %v851 = vunpack.c.h.b16 %v800
  %v852 = vunpack.c.l.b16 %v801
  %v853 = vunpack.c.h.b16 %v801
  %v854 = vunpack.c.l.b16 %v802
  %v855 = vunpack.c.l.b16 %v803
  %v856 = vunpack.c.h.b16 %v803
  %v857 = vunpack.c.l.b16 %v804
  %v858 = vunpack.c.h.b16 %v804
  %v859 = vunpack.c.l.b16 %v805
  %v860 = vunpack.c.h.b16 %v805
  %v861 = vunpack.c.l.b16 %v806
  %v862 = vunpack.c.h.b16 %v806
  %v863 = vunpack.c.l.b16 %v807
  %v864 = vunpack.c.l.b16 %v808
  %v865 = vunpack.c.h.b16 %v808
  %v866 = vunpack.c.l.b16 %v809
  %v867 = vunpack.c.h.b16 %v809
  %v868 = vunpack.c.l.b16 %v810
  %v869 = vunpack.c.h.b16 %v810
  %v870 = vunpack.c.l.b16 %v811
  %v871 = vunpack.c.h.b16 %v811
  %v872 = vunpack.c.l.b16 %v812
  %v873 = vunpack.c.l.b16 %v813
  %v874 = vunpack.c.h.b16 %v813
  %v875 = vunpack.c.l.b16 %v814
  %v876 = vunpack.c.h.b16 %v814
  %v877 = vunpack.c.l.b16 %v815
  %v878 = vunpack.c.h.b16 %v815
  %v879 = vunpack.c.l.b16 %v816
  %v880 = vunpack.c.h.b16 %v816
  %v881 = vunpack.c.l.b16 %v817
  %v882 = vpack.c.b16 %v855, %v846
  %v883 = vpack.c.b16 %v856, %v847
  %v884 = vpack.c.b16 %v857, %v848
  %v885 = vpack.c.b16 %v858, %v849
  %v886 = vpack.c.b16 %v859, %v850
  %v887 = vpack.c.b16 %v860, %v851
  %v888 = vpack.c.b16 %v861, %v852
  %v889 = vpack.c.b16 %v862, %v853
  %v890 = vpack.c.b16 %v863, %v854
  %v891 = vpack.c.b16 %v873, %v864
  %v892 = vpack.c.b16 %v874, %v865
  %v893 = vpack.c.b16 %v875, %v866
  %v894 = vpack.c.b16 %v876, %v867
  %v895 = vpack.c.b16 %v877, %v868
  %v896 = vpack.c.b16 %v878, %v869
  %v897 = vpack.c.b16 %v879, %v870
  %v898 = vpack.c.b16 %v880, %v871
  %v899 = vpack.c.b16 %v881, %v872
  %v919 = vsel %vm267, %v824, 0
  %v922 = vsel %vm267, %v825, 0
  %924 = vmatpush.bf16.msra.mxu0 0
  %925 = vmatpush.bf16.msra.mxu0 0
  %926 = vmatpush.bf16.msra.mxu0 0
  %927 = vmatpush.bf16.msra.mxu0 0
  %928 = vmatpush.bf16.msra.mxu0 0
  %929 = vmatpush.bf16.msra.mxu0 0
  %930 = vmatpush.bf16.msra.mxu0 %v891
  %931 = vmatpush.bf16.msra.mxu0 %v882
  %932 = vmatmul.bf16.gmra.mxu0 %v919
  %v933 = vpop.f32.mrf.mxu0
  %v934 = vadd.f32 0.0, %v933
  %v935 = vpop.f32.mrf.mxu0
  %v936 = vadd.f32 0.0, %v935
  %937 = vmatmul.bf16.gmra.mxu0 %v922
  %v938 = vpop.f32.mrf.mxu0
  %v939 = vadd.f32 0.0, %v938
  %v940 = vpop.f32.mrf.mxu0
  %941 = vdwg.mxu0
  %942 = vmatpush.bf16.msra.mxu0 0
  %943 = vmatpush.bf16.msra.mxu0 0
  %944 = vmatpush.bf16.msra.mxu0 0
  %945 = vmatpush.bf16.msra.mxu0 0
  %946 = vmatpush.bf16.msra.mxu0 0
  %947 = vmatpush.bf16.msra.mxu0 0
  %948 = vmatpush.bf16.msra.mxu0 %v892
  %949 = vmatpush.bf16.msra.mxu0 %v883
  %950 = vmatmul.bf16.gmra.mxu0 %v919
  %v951 = vpop.f32.mrf.mxu0
  %v952 = vadd.f32 0.0, %v951
  %v953 = vpop.f32.mrf.mxu0
  %v954 = vadd.f32 0.0, %v953
  %955 = vmatmul.bf16.gmra.mxu0 %v922
  %v956 = vpop.f32.mrf.mxu0
  %v957 = vadd.f32 0.0, %v956
  %v958 = vpop.f32.mrf.mxu0
  %959 = vdwg.mxu0
  %960 = vmatpush.bf16.msra.mxu0 0
  %961 = vmatpush.bf16.msra.mxu0 0
  %962 = vmatpush.bf16.msra.mxu0 0
  %963 = vmatpush.bf16.msra.mxu0 0
  %964 = vmatpush.bf16.msra.mxu0 0
  %965 = vmatpush.bf16.msra.mxu0 0
  %966 = vmatpush.bf16.msra.mxu0 %v893
  %967 = vmatpush.bf16.msra.mxu0 %v884
  %968 = vmatmul.bf16.gmra.mxu0 %v919
  %v969 = vpop.f32.mrf.mxu0
  %v970 = vadd.f32 0.0, %v969
  %v971 = vpop.f32.mrf.mxu0
  %v972 = vadd.f32 0.0, %v971
  %973 = vmatmul.bf16.gmra.mxu0 %v922
  %v974 = vpop.f32.mrf.mxu0
  %v975 = vadd.f32 0.0, %v974
  %v976 = vpop.f32.mrf.mxu0
  %977 = vdwg.mxu0
  %978 = vmatpush.bf16.msra.mxu0 0
  %979 = vmatpush.bf16.msra.mxu0 0
  %980 = vmatpush.bf16.msra.mxu0 0
  %981 = vmatpush.bf16.msra.mxu0 0
  %982 = vmatpush.bf16.msra.mxu0 0
  %983 = vmatpush.bf16.msra.mxu0 0
  %984 = vmatpush.bf16.msra.mxu0 %v894
  %985 = vmatpush.bf16.msra.mxu0 %v885
  %986 = vmatmul.bf16.gmra.mxu0 %v919
  %v987 = vpop.f32.mrf.mxu0
  %v988 = vadd.f32 0.0, %v987
  %v989 = vpop.f32.mrf.mxu0
  %v990 = vadd.f32 0.0, %v989
  %991 = vmatmul.bf16.gmra.mxu0 %v922
  %v992 = vpop.f32.mrf.mxu0
  %v993 = vadd.f32 0.0, %v992
  %v994 = vpop.f32.mrf.mxu0
  %995 = vdwg.mxu0
  %996 = vmatpush.bf16.msra.mxu0 0
  %997 = vmatpush.bf16.msra.mxu0 0
  %998 = vmatpush.bf16.msra.mxu0 0
  %999 = vmatpush.bf16.msra.mxu0 0
  %1000 = vmatpush.bf16.msra.mxu0 0
  %1001 = vmatpush.bf16.msra.mxu0 0
  %1002 = vmatpush.bf16.msra.mxu0 %v895
  %1003 = vmatpush.bf16.msra.mxu0 %v886
  %1004 = vmatmul.bf16.gmra.mxu0 %v919
  %v1005 = vpop.f32.mrf.mxu0
  %v1006 = vadd.f32 0.0, %v1005
  %v1007 = vpop.f32.mrf.mxu0
  %v1008 = vadd.f32 0.0, %v1007
  %1009 = vmatmul.bf16.gmra.mxu0 %v922
  %v1010 = vpop.f32.mrf.mxu0
  %v1011 = vadd.f32 0.0, %v1010
  %v1012 = vpop.f32.mrf.mxu0
  %1013 = vdwg.mxu0
  %1014 = vmatpush.bf16.msra.mxu0 0
  %1015 = vmatpush.bf16.msra.mxu0 0
  %1016 = vmatpush.bf16.msra.mxu0 0
  %1017 = vmatpush.bf16.msra.mxu0 0
  %1018 = vmatpush.bf16.msra.mxu0 0
  %1019 = vmatpush.bf16.msra.mxu0 0
  %1020 = vmatpush.bf16.msra.mxu0 %v896
  %1021 = vmatpush.bf16.msra.mxu0 %v887
  %1022 = vmatmul.bf16.gmra.mxu0 %v919
  %v1023 = vpop.f32.mrf.mxu0
  %v1024 = vadd.f32 0.0, %v1023
  %v1025 = vpop.f32.mrf.mxu0
  %v1026 = vadd.f32 0.0, %v1025
  %1027 = vmatmul.bf16.gmra.mxu0 %v922
  %v1028 = vpop.f32.mrf.mxu0
  %v1029 = vadd.f32 0.0, %v1028
  %v1030 = vpop.f32.mrf.mxu0
  %1031 = vdwg.mxu0
  %1032 = vmatpush.bf16.msra.mxu0 0
  %1033 = vmatpush.bf16.msra.mxu0 0
  %1034 = vmatpush.bf16.msra.mxu0 0
  %1035 = vmatpush.bf16.msra.mxu0 0
  %1036 = vmatpush.bf16.msra.mxu0 0
  %1037 = vmatpush.bf16.msra.mxu0 0
  %1038 = vmatpush.bf16.msra.mxu0 %v897
  %1039 = vmatpush.bf16.msra.mxu0 %v888
  %1040 = vmatmul.bf16.gmra.mxu0 %v919
  %v1041 = vpop.f32.mrf.mxu0
  %v1042 = vadd.f32 0.0, %v1041
  %v1043 = vpop.f32.mrf.mxu0
  %v1044 = vadd.f32 0.0, %v1043
  %1045 = vmatmul.bf16.gmra.mxu0 %v922
  %v1046 = vpop.f32.mrf.mxu0
  %v1047 = vadd.f32 0.0, %v1046
  %v1048 = vpop.f32.mrf.mxu0
  %1049 = vdwg.mxu0
  %1050 = vmatpush.bf16.msra.mxu0 0
  %1051 = vmatpush.bf16.msra.mxu0 0
  %1052 = vmatpush.bf16.msra.mxu0 0
  %1053 = vmatpush.bf16.msra.mxu0 0
  %1054 = vmatpush.bf16.msra.mxu0 0
  %1055 = vmatpush.bf16.msra.mxu0 0
  %1056 = vmatpush.bf16.msra.mxu0 %v898
  %1057 = vmatpush.bf16.msra.mxu0 %v889
  %1058 = vmatmul.bf16.gmra.mxu0 %v919
  %v1059 = vpop.f32.mrf.mxu0
  %v1060 = vadd.f32 0.0, %v1059
  %v1061 = vpop.f32.mrf.mxu0
  %v1062 = vadd.f32 0.0, %v1061
  %1063 = vmatmul.bf16.gmra.mxu0 %v922
  %v1064 = vpop.f32.mrf.mxu0
  %v1065 = vadd.f32 0.0, %v1064
  %v1066 = vpop.f32.mrf.mxu0
  %1067 = vdwg.mxu0
  %1068 = vmatpush.bf16.msra.mxu0 0
  %1069 = vmatpush.bf16.msra.mxu0 0
  %1070 = vmatpush.bf16.msra.mxu0 0
  %1071 = vmatpush.bf16.msra.mxu0 0
  %1072 = vmatpush.bf16.msra.mxu0 0
  %1073 = vmatpush.bf16.msra.mxu0 0
  %1074 = vmatpush.bf16.msra.mxu0 %v899
  %1075 = vmatpush.bf16.msra.mxu0 %v890
  %1076 = vmatmul.bf16.gmra.mxu0 %v919
  %v1077 = vpop.f32.mrf.mxu0
  %v1078 = vadd.f32 0.0, %v1077
  %v1079 = vpop.f32.mrf.mxu0
  %v1080 = vadd.f32 0.0, %v1079
  %1081 = vmatmul.bf16.gmra.mxu0 %v922
  %v1082 = vpop.f32.mrf.mxu0
  %v1083 = vadd.f32 0.0, %v1082
  %v1084 = vpop.f32.mrf.mxu0
  %1085 = vdwg.mxu0
  %v1086 = vpack.c.bf16 %v936, %v934
  %v1087 = vpack.c.bf16 %v952, %v939
  %v1088 = vpack.c.bf16 %v957, %v954
  %v1089 = vpack.c.bf16 %v972, %v970
  %v1090 = vpack.c.bf16 %v988, %v975
  %v1091 = vpack.c.bf16 %v993, %v990
  %v1092 = vpack.c.bf16 %v1008, %v1006
  %v1093 = vpack.c.bf16 %v1024, %v1011
  %v1094 = vpack.c.bf16 %v1029, %v1026
  %v1095 = vpack.c.bf16 %v1044, %v1042
  %v1096 = vpack.c.bf16 %v1060, %v1047
  %v1097 = vpack.c.bf16 %v1065, %v1062
  %v1098 = vpack.c.bf16 %v1080, %v1078
  %v1099 = vpack.c.bf16 %v1083, %v1083
  %v1100 = vld [vmem:[%s6] sm:$0xff]
  %v1101 = vld [vmem:[%s6 + $0x8] sm:$0xff]
  %v1102 = vld [vmem:[%s6 + $0x10] sm:$0xff]
  %v1103 = vld [vmem:[%s6 + $0x18] sm:$0xff]
  %v1104 = vld [vmem:[%s6 + $0x20] sm:$0xff]
  %v1105 = vld [vmem:[%s6 + $0x28] sm:$0xff]
  %v1106 = vld [vmem:[%s6 + $0x30] sm:$0xff]
  %v1114 = vunpack.c.l.b16 %v1100
  %v1115 = vunpack.c.h.b16 %v1100
  %v1116 = vunpack.c.l.b16 %v1101
  %v1117 = vunpack.c.h.b16 %v1101
  %v1118 = vunpack.c.l.b16 %v1102
  %v1119 = vunpack.c.h.b16 %v1102
  %v1120 = vunpack.c.l.b16 %v1103
  %v1121 = vunpack.c.h.b16 %v1103
  %v1122 = vunpack.c.l.b16 %v1104
  %v1123 = vunpack.c.h.b16 %v1104
  %v1124 = vunpack.c.l.b16 %v1105
  %v1125 = vunpack.c.h.b16 %v1105
  %v1126 = vunpack.c.l.b16 %v1106
  %v1127 = vunpack.c.h.b16 %v1106
  %v1128 = vpack.c.b16 %v1116, %v1114
  %v1129 = vpack.c.b16 %v1117, %v1115
  %v1130 = vpack.c.b16 %v1120, %v1118
  %v1131 = vpack.c.b16 %v1121, %v1119
  %v1132 = vpack.c.b16 %v1124, %v1122
  %v1133 = vpack.c.b16 %v1125, %v1123
  %v1134 = vpack.c.b16 %v1126, %v1126
  %v1135 = vpack.c.b16 %v1127, %v1127
  %vm1140 = vcmask 719872
  %v1142 = vsel %vm1140, %v1129, 0
  %v1145 = vsel %vm1140, %v1131, 0
  %v1148 = vsel %vm1140, %v1133, 0
  %v1151 = vsel %vm1140, %v1135, 0
  %v1154 = vsel %vm698, %v1099, 0
  %1156 = vmatpush.bf16.msra.mxu0 %v1093
  %1157 = vmatpush.bf16.msra.mxu0 %v1092
  %1158 = vmatpush.bf16.msra.mxu0 %v1091
  %1159 = vmatpush.bf16.msra.mxu0 %v1090
  %1160 = vmatpush.bf16.msra.mxu0 %v1089
  %1161 = vmatpush.bf16.msra.mxu0 %v1088
  %1162 = vmatpush.bf16.msra.mxu0 %v1087
  %1163 = vmatpush.bf16.msra.mxu0 %v1086
  %1164 = vmatmul.bf16.gmra.mxu0 %v1128
  %v1165 = vpop.f32.mrf.mxu0
  %v1166 = vadd.f32 0.0, %v1165
  %v1167 = vpop.f32.mrf.mxu0
  %v1168 = vadd.f32 0.0, %v1167
  %1169 = vmatmul.bf16.gmra.mxu0 %v1130
  %v1170 = vpop.f32.mrf.mxu0
  %v1171 = vadd.f32 0.0, %v1170
  %v1172 = vpop.f32.mrf.mxu0
  %v1173 = vadd.f32 0.0, %v1172
  %1174 = vmatmul.bf16.gmra.mxu0 %v1132
  %v1175 = vpop.f32.mrf.mxu0
  %v1176 = vadd.f32 0.0, %v1175
  %v1177 = vpop.f32.mrf.mxu0
  %v1178 = vadd.f32 0.0, %v1177
  %1179 = vmatmul.bf16.gmra.mxu0 %v1134
  %v1180 = vpop.f32.mrf.mxu0
  %v1181 = vadd.f32 0.0, %v1180
  %v1182 = vpop.f32.mrf.mxu0
  %1183 = vdwg.mxu0
  %1184 = vmatpush.bf16.msra.mxu0 0
  %1185 = vmatpush.bf16.msra.mxu0 0
  %1186 = vmatpush.bf16.msra.mxu0 %v1154
  %1187 = vmatpush.bf16.msra.mxu0 %v1098
  %1188 = vmatpush.bf16.msra.mxu0 %v1097
  %1189 = vmatpush.bf16.msra.mxu0 %v1096
  %1190 = vmatpush.bf16.msra.mxu0 %v1095
  %1191 = vmatpush.bf16.msra.mxu0 %v1094
  %1192 = vmatmul.bf16.gmra.mxu0 %v1142
  %v1193 = vpop.f32.mrf.mxu0
  %v1194 = vadd.f32 %v1166, %v1193
  %v1195 = vpop.f32.mrf.mxu0
  %v1196 = vadd.f32 %v1168, %v1195
  %1197 = vmatmul.bf16.gmra.mxu0 %v1145
  %v1198 = vpop.f32.mrf.mxu0
  %v1199 = vadd.f32 %v1171, %v1198
  %v1200 = vpop.f32.mrf.mxu0
  %v1201 = vadd.f32 %v1173, %v1200
  %1202 = vmatmul.bf16.gmra.mxu0 %v1148
  %v1203 = vpop.f32.mrf.mxu0
  %v1204 = vadd.f32 %v1176, %v1203
  %v1205 = vpop.f32.mrf.mxu0
  %v1206 = vadd.f32 %v1178, %v1205
  %1207 = vmatmul.bf16.gmra.mxu0 %v1151
  %v1208 = vpop.f32.mrf.mxu0
  %v1209 = vadd.f32 %v1181, %v1208
  %v1210 = vpop.f32.mrf.mxu0
  %1211 = vdwg.mxu0
  %v1212 = vadd.s32 %v721, 24
  %v1213 = vadd.s32 %v721, 32
  %v1214 = vadd.s32 %v721, 40
  %v1215 = vadd.s32 %v721, 48
  %vm1216 = vcmp.lt.s32.totalorder %v721, 50
  %vm1217 = vcmp.lt.s32.totalorder %v722, 50
  %vm1218 = vcmp.lt.s32.totalorder %v723, 50
  %vm1219 = vcmp.lt.s32.totalorder %v1212, 50
  %vm1220 = vcmp.lt.s32.totalorder %v1213, 50
  %vm1221 = vcmp.lt.s32.totalorder %v1214, 50
  %vm1222 = vcmp.lt.s32.totalorder %v1215, 50
  %v1223 = vsel %vm1216, %v1194, 0.0
  %v1224 = vsel %vm1217, %v1196, 0.0
  %v1225 = vsel %vm1218, %v1199, 0.0
  %v1226 = vsel %vm1219, %v1201, 0.0
  %v1227 = vsel %vm1220, %v1204, 0.0
  %v1228 = vsel %vm1221, %v1206, 0.0
  %v1229 = vsel %vm1222, %v1209, 0.0
  %v1230 = vadd.f32 %v1223, %v1224
  %v1231 = vadd.f32 %v1230, %v1225
  %v1232 = vadd.f32 %v1231, %v1226
  %v1233 = vadd.f32 %v1232, %v1227
  %v1234 = vadd.f32 %v1233, %v1228
  %v1235 = vadd.f32 %v1234, %v1229
  %v1236 = vrot.slane %v1235, 4
  %v1237 = vadd.f32 %v1235, %v1236
  %v1238 = vrot.slane %v1237, 2
  %v1239 = vadd.f32 %v1237, %v1238
  %v1240 = vrot.slane %v1239, 1
  %v1241 = vadd.f32 %v1239, %v1240
  %v1242 = vrcp.pop 50.0
  %v1243 = vmul.f32 50.0, %v1242
  %v1244 = vsub.f32 1.0, %v1243
  %v1245 = vmul.f32 %v1242, %v1244
  %v1246 = vadd.f32 %v1242, %v1245
  %vm1247 = vweird.f32 %v1242
  %v1248 = vsel %vm1247, %v1242, %v1246
  %v1249 = vmul.f32 %v1241, %v1248
  %v1250 = vsub.f32 %v1194, %v1249
  %v1251 = vsub.f32 %v1196, %v1249
  %v1252 = vsub.f32 %v1199, %v1249
  %v1253 = vsub.f32 %v1201, %v1249
  %v1254 = vsub.f32 %v1204, %v1249
  %v1255 = vsub.f32 %v1206, %v1249
  %v1256 = vsub.f32 %v1209, %v1249
  %v1257 = vsel %vm1216, %v1250, 0.0
  %v1258 = vsel %vm1217, %v1251, 0.0
  %v1259 = vsel %vm1218, %v1252, 0.0
  %v1260 = vsel %vm1219, %v1253, 0.0
  %v1261 = vsel %vm1220, %v1254, 0.0
  %v1262 = vsel %vm1221, %v1255, 0.0
  %v1263 = vsel %vm1222, %v1256, 0.0
  %v1264 = vmul.f32 %v1257, %v1257
  %v1265 = vmul.f32 %v1258, %v1258
  %v1266 = vmul.f32 %v1259, %v1259
  %v1267 = vmul.f32 %v1260, %v1260
  %v1268 = vmul.f32 %v1261, %v1261
  %v1269 = vmul.f32 %v1262, %v1262
  %v1270 = vmul.f32 %v1263, %v1263
  %v1271 = vadd.f32 %v1264, %v1265
  %v1272 = vadd.f32 %v1271, %v1266
  %v1273 = vadd.f32 %v1272, %v1267
  %v1274 = vadd.f32 %v1273, %v1268
  %v1275 = vadd.f32 %v1274, %v1269
  %v1276 = vadd.f32 %v1275, %v1270
  %v1277 = vrot.slane %v1276, 4
  %v1278 = vadd.f32 %v1276, %v1277
  %v1279 = vrot.slane %v1278, 2
  %v1280 = vadd.f32 %v1278, %v1279
  %v1281 = vrot.slane %v1280, 1
  %v1282 = vadd.f32 %v1280, %v1281
  %v1283 = vmul.f32 %v1282, %v1248
  %v1284 = vadd.f32 %v1283, 1e-05
  %v1285 = vrsqrt.pop %v1284
  %v1286 = vmul.f32 %v1285, %v1284
  %v1287 = vmul.f32 %v1286, %v1285
  %v1288 = vmul.f32 0.5, %v1287
  %v1289 = vsub.f32 1.5, %v1288
  %v1290 = vmul.f32 %v1285, %v1289
  %vm1291 = vweird.f32 %v1284
  %vm1292 = vweird.f32 %v1285
  %vm1293 = vmor %vm1291, %vm1292
  %v1294 = vsel %vm1293, %v1285, %v1290
  %v1295 = vmul.f32 %v36, %v1294
  %v1296 = vmul.f32 %v1249, %v1295
  %v1298 = vrot.slane %v1296, 7
  %v1300 = vsub.f32 %v36, %v1298
  %v1301 = vperm.slane %v1295, 4
  %v1302 = vmul.f32 %v1194, %v1301
  %v1303 = vmul.f32 %v1196, %v1301
  %v1304 = vmul.f32 %v1199, %v1301
  %v1305 = vmul.f32 %v1201, %v1301
  %v1306 = vmul.f32 %v1204, %v1301
  %v1307 = vmul.f32 %v1206, %v1301
  %v1308 = vmul.f32 %v1209, %v1301
  %v1309 = vperm.slane %v1300, 5
  %v1310 = vadd.f32 %v1302, %v1309
  %v1311 = vadd.f32 %v1303, %v1309
  %v1312 = vadd.f32 %v1304, %v1309
  %v1313 = vadd.f32 %v1305, %v1309
  %v1314 = vadd.f32 %v1306, %v1309
  %v1315 = vadd.f32 %v1307, %v1309
  %v1316 = vadd.f32 %v1308, %v1309
  %v1317 = vmax.f32 %v1310, 0.0
  %v1318 = vmax.f32 %v1311, 0.0
  %v1319 = vmax.f32 %v1312, 0.0
  %v1320 = vmax.f32 %v1313, 0.0
  %v1321 = vmax.f32 %v1314, 0.0
  %v1322 = vmax.f32 %v1315, 0.0
  %v1323 = vmax.f32 %v1316, 0.0
  %v1324 = vsel %vm1216, %v1317, 0.0
  %v1325 = vsel %vm1217, %v1318, 0.0
  %v1326 = vsel %vm1218, %v1319, 0.0
  %v1327 = vsel %vm1219, %v1320, 0.0
  %v1328 = vsel %vm1220, %v1321, 0.0
  %v1329 = vsel %vm1221, %v1322, 0.0
  %v1330 = vsel %vm1222, %v1323, 0.0
  %v1331 = vpack.c.bf16 %v1324, %v1324
  %v1332 = vpack.c.bf16 %v1325, %v1325
  %v1333 = vpack.c.bf16 %v1326, %v1326
  %v1334 = vpack.c.bf16 %v1327, %v1327
  %v1335 = vpack.c.bf16 %v1328, %v1328
  %v1336 = vpack.c.bf16 %v1329, %v1329
  %v1337 = vpack.c.bf16 %v1330, %v1330
  %v1338 = vld [vmem:[%s7] sm:$0xff]
  %v1339 = vld [vmem:[%s7 + $0x8] sm:$0xff]
  %v1340 = vld [vmem:[%s7 + $0x10] sm:$0xff]
  %v1341 = vld [vmem:[%s7 + $0x18] sm:$0xff]
  %v1342 = vld [vmem:[%s7 + $0x20] sm:$0xf]
  %v1343 = vld [vmem:[%s7 + $0x24] sm:$0xff]
  %v1344 = vld [vmem:[%s7 + $0x2c] sm:$0xff]
  %v1345 = vld [vmem:[%s7 + $0x34] sm:$0xff]
  %v1346 = vld [vmem:[%s7 + $0x3c] sm:$0xff]
  %v1347 = vld [vmem:[%s7 + $0x44] sm:$0xf]
  %v1348 = vld [vmem:[%s7 + $0x48] sm:$0xff]
  %v1349 = vld [vmem:[%s7 + $0x50] sm:$0xff]
  %v1350 = vld [vmem:[%s7 + $0x58] sm:$0xff]
  %v1351 = vld [vmem:[%s7 + $0x60] sm:$0xff]
  %v1352 = vld [vmem:[%s7 + $0x68] sm:$0xf]
  %v1353 = vld [vmem:[%s7 + $0x6c] sm:$0xff]
  %v1354 = vld [vmem:[%s7 + $0x74] sm:$0xff]
  %v1355 = vld [vmem:[%s7 + $0x7c] sm:$0xff]
  %v1356 = vld [vmem:[%s7 + $0x84] sm:$0xff]
  %v1357 = vld [vmem:[%s7 + $0x8c] sm:$0xf]
  %v1365 = vunpack.c.l.b16 %v1331
  %v1366 = vunpack.c.l.b16 %v1332
  %v1367 = vunpack.c.l.b16 %v1333
  %v1368 = vunpack.c.l.b16 %v1334
  %v1369 = vunpack.c.l.b16 %v1335
  %v1370 = vunpack.c.l.b16 %v1336
  %v1371 = vunpack.c.l.b16 %v1337
  %v1372 = vpack.c.b16 %v1366, %v1365
  %v1373 = vpack.c.b16 %v1368, %v1367
  %v1374 = vpack.c.b16 %v1370, %v1369
  %v1375 = vpack.c.b16 %v1371, %v1371
  %v1396 = vunpack.c.l.b16 %v1338
  %v1397 = vunpack.c.h.b16 %v1338
  %v1398 = vunpack.c.l.b16 %v1339
  %v1399 = vunpack.c.h.b16 %v1339
  %v1400 = vunpack.c.l.b16 %v1340
  %v1401 = vunpack.c.h.b16 %v1340
  %v1402 = vunpack.c.l.b16 %v1341
  %v1403 = vunpack.c.h.b16 %v1341
  %v1404 = vunpack.c.l.b16 %v1342
  %v1405 = vunpack.c.l.b16 %v1343
  %v1406 = vunpack.c.h.b16 %v1343
  %v1407 = vunpack.c.l.b16 %v1344
  %v1408 = vunpack.c.h.b16 %v1344
  %v1409 = vunpack.c.l.b16 %v1345
  %v1410 = vunpack.c.h.b16 %v1345
  %v1411 = vunpack.c.l.b16 %v1346
  %v1412 = vunpack.c.h.b16 %v1346
  %v1413 = vunpack.c.l.b16 %v1347
  %v1414 = vunpack.c.l.b16 %v1348
  %v1415 = vunpack.c.h.b16 %v1348
  %v1416 = vunpack.c.l.b16 %v1349
  %v1417 = vunpack.c.h.b16 %v1349
  %v1418 = vunpack.c.l.b16 %v1350
  %v1419 = vunpack.c.h.b16 %v1350
  %v1420 = vunpack.c.l.b16 %v1351
  %v1421 = vunpack.c.h.b16 %v1351
  %v1422 = vunpack.c.l.b16 %v1352
  %v1423 = vunpack.c.l.b16 %v1353
  %v1424 = vunpack.c.h.b16 %v1353
  %v1425 = vunpack.c.l.b16 %v1354
  %v1426 = vunpack.c.h.b16 %v1354
  %v1427 = vunpack.c.l.b16 %v1355
  %v1428 = vunpack.c.h.b16 %v1355
  %v1429 = vunpack.c.l.b16 %v1356
  %v1430 = vunpack.c.h.b16 %v1356
  %v1431 = vunpack.c.l.b16 %v1357
  %v1432 = vpack.c.b16 %v1405, %v1396
  %v1433 = vpack.c.b16 %v1406, %v1397
  %v1434 = vpack.c.b16 %v1407, %v1398
  %v1435 = vpack.c.b16 %v1408, %v1399
  %v1436 = vpack.c.b16 %v1409, %v1400
  %v1437 = vpack.c.b16 %v1410, %v1401
  %v1438 = vpack.c.b16 %v1411, %v1402
  %v1439 = vpack.c.b16 %v1412, %v1403
  %v1440 = vpack.c.b16 %v1413, %v1404
  %v1441 = vpack.c.b16 %v1423, %v1414
  %v1442 = vpack.c.b16 %v1424, %v1415
  %v1443 = vpack.c.b16 %v1425, %v1416
  %v1444 = vpack.c.b16 %v1426, %v1417
  %v1445 = vpack.c.b16 %v1427, %v1418
  %v1446 = vpack.c.b16 %v1428, %v1419
  %v1447 = vpack.c.b16 %v1429, %v1420
  %v1448 = vpack.c.b16 %v1430, %v1421
  %v1449 = vpack.c.b16 %v1431, %v1422
  %v1469 = vsel %vm267, %v1372, 0
  %v1472 = vsel %vm267, %v1373, 0
  %v1475 = vsel %vm267, %v1374, 0
  %v1478 = vsel %vm267, %v1375, 0
  %1480 = vmatpush.bf16.msra.mxu0 0
  %1481 = vmatpush.bf16.msra.mxu0 0
  %1482 = vmatpush.bf16.msra.mxu0 0
  %1483 = vmatpush.bf16.msra.mxu0 0
  %1484 = vmatpush.bf16.msra.mxu0 0
  %1485 = vmatpush.bf16.msra.mxu0 0
  %1486 = vmatpush.bf16.msra.mxu0 %v1441
  %1487 = vmatpush.bf16.msra.mxu0 %v1432
  %1488 = vmatmul.bf16.gmra.mxu0 %v1469
  %v1489 = vpop.f32.mrf.mxu0
  %v1490 = vadd.f32 0.0, %v1489
  %v1491 = vpop.f32.mrf.mxu0
  %v1492 = vadd.f32 0.0, %v1491
  %1493 = vmatmul.bf16.gmra.mxu0 %v1472
  %v1494 = vpop.f32.mrf.mxu0
  %v1495 = vadd.f32 0.0, %v1494
  %v1496 = vpop.f32.mrf.mxu0
  %v1497 = vadd.f32 0.0, %v1496
  %1498 = vmatmul.bf16.gmra.mxu0 %v1475
  %v1499 = vpop.f32.mrf.mxu0
  %v1500 = vadd.f32 0.0, %v1499
  %v1501 = vpop.f32.mrf.mxu0
  %v1502 = vadd.f32 0.0, %v1501
  %1503 = vmatmul.bf16.gmra.mxu0 %v1478
  %v1504 = vpop.f32.mrf.mxu0
  %v1505 = vadd.f32 0.0, %v1504
  %v1506 = vpop.f32.mrf.mxu0
  %1507 = vdwg.mxu0
  %1508 = vmatpush.bf16.msra.mxu0 0
  %1509 = vmatpush.bf16.msra.mxu0 0
  %1510 = vmatpush.bf16.msra.mxu0 0
  %1511 = vmatpush.bf16.msra.mxu0 0
  %1512 = vmatpush.bf16.msra.mxu0 0
  %1513 = vmatpush.bf16.msra.mxu0 0
  %1514 = vmatpush.bf16.msra.mxu0 %v1442
  %1515 = vmatpush.bf16.msra.mxu0 %v1433
  %1516 = vmatmul.bf16.gmra.mxu0 %v1469
  %v1517 = vpop.f32.mrf.mxu0
  %v1518 = vadd.f32 0.0, %v1517
  %v1519 = vpop.f32.mrf.mxu0
  %v1520 = vadd.f32 0.0, %v1519
  %1521 = vmatmul.bf16.gmra.mxu0 %v1472
  %v1522 = vpop.f32.mrf.mxu0
  %v1523 = vadd.f32 0.0, %v1522
  %v1524 = vpop.f32.mrf.mxu0
  %v1525 = vadd.f32 0.0, %v1524
  %1526 = vmatmul.bf16.gmra.mxu0 %v1475
  %v1527 = vpop.f32.mrf.mxu0
  %v1528 = vadd.f32 0.0, %v1527
  %v1529 = vpop.f32.mrf.mxu0
  %v1530 = vadd.f32 0.0, %v1529
  %1531 = vmatmul.bf16.gmra.mxu0 %v1478
  %v1532 = vpop.f32.mrf.mxu0
  %v1533 = vadd.f32 0.0, %v1532
  %v1534 = vpop.f32.mrf.mxu0
  %1535 = vdwg.mxu0
  %1536 = vmatpush.bf16.msra.mxu0 0
  %1537 = vmatpush.bf16.msra.mxu0 0
  %1538 = vmatpush.bf16.msra.mxu0 0
  %1539 = vmatpush.bf16.msra.mxu0 0
  %1540 = vmatpush.bf16.msra.mxu0 0
  %1541 = vmatpush.bf16.msra.mxu0 0
  %1542 = vmatpush.bf16.msra.mxu0 %v1443
  %1543 = vmatpush.bf16.msra.mxu0 %v1434
  %1544 = vmatmul.bf16.gmra.mxu0 %v1469
  %v1545 = vpop.f32.mrf.mxu0
  %v1546 = vadd.f32 0.0, %v1545
  %v1547 = vpop.f32.mrf.mxu0
  %v1548 = vadd.f32 0.0, %v1547
  %1549 = vmatmul.bf16.gmra.mxu0 %v1472
  %v1550 = vpop.f32.mrf.mxu0
  %v1551 = vadd.f32 0.0, %v1550
  %v1552 = vpop.f32.mrf.mxu0
  %v1553 = vadd.f32 0.0, %v1552
  %1554 = vmatmul.bf16.gmra.mxu0 %v1475
  %v1555 = vpop.f32.mrf.mxu0
  %v1556 = vadd.f32 0.0, %v1555
  %v1557 = vpop.f32.mrf.mxu0
  %v1558 = vadd.f32 0.0, %v1557
  %1559 = vmatmul.bf16.gmra.mxu0 %v1478
  %v1560 = vpop.f32.mrf.mxu0
  %v1561 = vadd.f32 0.0, %v1560
  %v1562 = vpop.f32.mrf.mxu0
  %1563 = vdwg.mxu0
  %1564 = vmatpush.bf16.msra.mxu0 0
  %1565 = vmatpush.bf16.msra.mxu0 0
  %1566 = vmatpush.bf16.msra.mxu0 0
  %1567 = vmatpush.bf16.msra.mxu0 0
  %1568 = vmatpush.bf16.msra.mxu0 0
  %1569 = vmatpush.bf16.msra.mxu0 0
  %1570 = vmatpush.bf16.msra.mxu0 %v1444
  %1571 = vmatpush.bf16.msra.mxu0 %v1435
  %1572 = vmatmul.bf16.gmra.mxu0 %v1469
  %v1573 = vpop.f32.mrf.mxu0
  %v1574 = vadd.f32 0.0, %v1573
  %v1575 = vpop.f32.mrf.mxu0
  %v1576 = vadd.f32 0.0, %v1575
  %1577 = vmatmul.bf16.gmra.mxu0 %v1472
  %v1578 = vpop.f32.mrf.mxu0
  %v1579 = vadd.f32 0.0, %v1578
  %v1580 = vpop.f32.mrf.mxu0
  %v1581 = vadd.f32 0.0, %v1580
  %1582 = vmatmul.bf16.gmra.mxu0 %v1475
  %v1583 = vpop.f32.mrf.mxu0
  %v1584 = vadd.f32 0.0, %v1583
  %v1585 = vpop.f32.mrf.mxu0
  %v1586 = vadd.f32 0.0, %v1585
  %1587 = vmatmul.bf16.gmra.mxu0 %v1478
  %v1588 = vpop.f32.mrf.mxu0
  %v1589 = vadd.f32 0.0, %v1588
  %v1590 = vpop.f32.mrf.mxu0
  %1591 = vdwg.mxu0
  %1592 = vmatpush.bf16.msra.mxu0 0
  %1593 = vmatpush.bf16.msra.mxu0 0
  %1594 = vmatpush.bf16.msra.mxu0 0
  %1595 = vmatpush.bf16.msra.mxu0 0
  %1596 = vmatpush.bf16.msra.mxu0 0
  %1597 = vmatpush.bf16.msra.mxu0 0
  %1598 = vmatpush.bf16.msra.mxu0 %v1445
  %1599 = vmatpush.bf16.msra.mxu0 %v1436
  %1600 = vmatmul.bf16.gmra.mxu0 %v1469
  %v1601 = vpop.f32.mrf.mxu0
  %v1602 = vadd.f32 0.0, %v1601
  %v1603 = vpop.f32.mrf.mxu0
  %v1604 = vadd.f32 0.0, %v1603
  %1605 = vmatmul.bf16.gmra.mxu0 %v1472
  %v1606 = vpop.f32.mrf.mxu0
  %v1607 = vadd.f32 0.0, %v1606
  %v1608 = vpop.f32.mrf.mxu0
  %v1609 = vadd.f32 0.0, %v1608
  %1610 = vmatmul.bf16.gmra.mxu0 %v1475
  %v1611 = vpop.f32.mrf.mxu0
  %v1612 = vadd.f32 0.0, %v1611
  %v1613 = vpop.f32.mrf.mxu0
  %v1614 = vadd.f32 0.0, %v1613
  %1615 = vmatmul.bf16.gmra.mxu0 %v1478
  %v1616 = vpop.f32.mrf.mxu0
  %v1617 = vadd.f32 0.0, %v1616
  %v1618 = vpop.f32.mrf.mxu0
  %1619 = vdwg.mxu0
  %1620 = vmatpush.bf16.msra.mxu0 0
  %1621 = vmatpush.bf16.msra.mxu0 0
  %1622 = vmatpush.bf16.msra.mxu0 0
  %1623 = vmatpush.bf16.msra.mxu0 0
  %1624 = vmatpush.bf16.msra.mxu0 0
  %1625 = vmatpush.bf16.msra.mxu0 0
  %1626 = vmatpush.bf16.msra.mxu0 %v1446
  %1627 = vmatpush.bf16.msra.mxu0 %v1437
  %1628 = vmatmul.bf16.gmra.mxu0 %v1469
  %v1629 = vpop.f32.mrf.mxu0
  %v1630 = vadd.f32 0.0, %v1629
  %v1631 = vpop.f32.mrf.mxu0
  %v1632 = vadd.f32 0.0, %v1631
  %1633 = vmatmul.bf16.gmra.mxu0 %v1472
  %v1634 = vpop.f32.mrf.mxu0
  %v1635 = vadd.f32 0.0, %v1634
  %v1636 = vpop.f32.mrf.mxu0
  %v1637 = vadd.f32 0.0, %v1636
  %1638 = vmatmul.bf16.gmra.mxu0 %v1475
  %v1639 = vpop.f32.mrf.mxu0
  %v1640 = vadd.f32 0.0, %v1639
  %v1641 = vpop.f32.mrf.mxu0
  %v1642 = vadd.f32 0.0, %v1641
  %1643 = vmatmul.bf16.gmra.mxu0 %v1478
  %v1644 = vpop.f32.mrf.mxu0
  %v1645 = vadd.f32 0.0, %v1644
  %v1646 = vpop.f32.mrf.mxu0
  %1647 = vdwg.mxu0
  %1648 = vmatpush.bf16.msra.mxu0 0
  %1649 = vmatpush.bf16.msra.mxu0 0
  %1650 = vmatpush.bf16.msra.mxu0 0
  %1651 = vmatpush.bf16.msra.mxu0 0
  %1652 = vmatpush.bf16.msra.mxu0 0
  %1653 = vmatpush.bf16.msra.mxu0 0
  %1654 = vmatpush.bf16.msra.mxu0 %v1447
  %1655 = vmatpush.bf16.msra.mxu0 %v1438
  %1656 = vmatmul.bf16.gmra.mxu0 %v1469
  %v1657 = vpop.f32.mrf.mxu0
  %v1658 = vadd.f32 0.0, %v1657
  %v1659 = vpop.f32.mrf.mxu0
  %v1660 = vadd.f32 0.0, %v1659
  %1661 = vmatmul.bf16.gmra.mxu0 %v1472
  %v1662 = vpop.f32.mrf.mxu0
  %v1663 = vadd.f32 0.0, %v1662
  %v1664 = vpop.f32.mrf.mxu0
  %v1665 = vadd.f32 0.0, %v1664
  %1666 = vmatmul.bf16.gmra.mxu0 %v1475
  %v1667 = vpop.f32.mrf.mxu0
  %v1668 = vadd.f32 0.0, %v1667
  %v1669 = vpop.f32.mrf.mxu0
  %v1670 = vadd.f32 0.0, %v1669
  %1671 = vmatmul.bf16.gmra.mxu0 %v1478
  %v1672 = vpop.f32.mrf.mxu0
  %v1673 = vadd.f32 0.0, %v1672
  %v1674 = vpop.f32.mrf.mxu0
  %1675 = vdwg.mxu0
  %1676 = vmatpush.bf16.msra.mxu0 0
  %1677 = vmatpush.bf16.msra.mxu0 0
  %1678 = vmatpush.bf16.msra.mxu0 0
  %1679 = vmatpush.bf16.msra.mxu0 0
  %1680 = vmatpush.bf16.msra.mxu0 0
  %1681 = vmatpush.bf16.msra.mxu0 0
  %1682 = vmatpush.bf16.msra.mxu0 %v1448
  %1683 = vmatpush.bf16.msra.mxu0 %v1439
  %1684 = vmatmul.bf16.gmra.mxu0 %v1469
  %v1685 = vpop.f32.mrf.mxu0
  %v1686 = vadd.f32 0.0, %v1685
  %v1687 = vpop.f32.mrf.mxu0
  %v1688 = vadd.f32 0.0, %v1687
  %1689 = vmatmul.bf16.gmra.mxu0 %v1472
  %v1690 = vpop.f32.mrf.mxu0
  %v1691 = vadd.f32 0.0, %v1690
  %v1692 = vpop.f32.mrf.mxu0
  %v1693 = vadd.f32 0.0, %v1692
  %1694 = vmatmul.bf16.gmra.mxu0 %v1475
  %v1695 = vpop.f32.mrf.mxu0
  %v1696 = vadd.f32 0.0, %v1695
  %v1697 = vpop.f32.mrf.mxu0
  %v1698 = vadd.f32 0.0, %v1697
  %1699 = vmatmul.bf16.gmra.mxu0 %v1478
  %v1700 = vpop.f32.mrf.mxu0
  %v1701 = vadd.f32 0.0, %v1700
  %v1702 = vpop.f32.mrf.mxu0
  %1703 = vdwg.mxu0
  %1704 = vmatpush.bf16.msra.mxu0 0
  %1705 = vmatpush.bf16.msra.mxu0 0
  %1706 = vmatpush.bf16.msra.mxu0 0
  %1707 = vmatpush.bf16.msra.mxu0 0
  %1708 = vmatpush.bf16.msra.mxu0 0
  %1709 = vmatpush.bf16.msra.mxu0 0
  %1710 = vmatpush.bf16.msra.mxu0 %v1449
  %1711 = vmatpush.bf16.msra.mxu0 %v1440
  %1712 = vmatmul.bf16.gmra.mxu0 %v1469
  %v1713 = vpop.f32.mrf.mxu0
  %v1714 = vadd.f32 0.0, %v1713
  %v1715 = vpop.f32.mrf.mxu0
  %v1716 = vadd.f32 0.0, %v1715
  %1717 = vmatmul.bf16.gmra.mxu0 %v1472
  %v1718 = vpop.f32.mrf.mxu0
  %v1719 = vadd.f32 0.0, %v1718
  %v1720 = vpop.f32.mrf.mxu0
  %v1721 = vadd.f32 0.0, %v1720
  %1722 = vmatmul.bf16.gmra.mxu0 %v1475
  %v1723 = vpop.f32.mrf.mxu0
  %v1724 = vadd.f32 0.0, %v1723
  %v1725 = vpop.f32.mrf.mxu0
  %v1726 = vadd.f32 0.0, %v1725
  %1727 = vmatmul.bf16.gmra.mxu0 %v1478
  %v1728 = vpop.f32.mrf.mxu0
  %v1729 = vadd.f32 0.0, %v1728
  %v1730 = vpop.f32.mrf.mxu0
  %1731 = vdwg.mxu0
  %v1732 = vpack.c.bf16 %v1492, %v1490
  %v1733 = vpack.c.bf16 %v1497, %v1495
  %v1734 = vpack.c.bf16 %v1502, %v1500
  %v1735 = vpack.c.bf16 %v1518, %v1505
  %v1736 = vpack.c.bf16 %v1523, %v1520
  %v1737 = vpack.c.bf16 %v1528, %v1525
  %v1738 = vpack.c.bf16 %v1533, %v1530
  %v1739 = vpack.c.bf16 %v1548, %v1546
  %v1740 = vpack.c.bf16 %v1553, %v1551
  %v1741 = vpack.c.bf16 %v1558, %v1556
  %v1742 = vpack.c.bf16 %v1574, %v1561
  %v1743 = vpack.c.bf16 %v1579, %v1576
  %v1744 = vpack.c.bf16 %v1584, %v1581
  %v1745 = vpack.c.bf16 %v1589, %v1586
  %v1746 = vpack.c.bf16 %v1604, %v1602
  %v1747 = vpack.c.bf16 %v1609, %v1607
  %v1748 = vpack.c.bf16 %v1614, %v1612
  %v1749 = vpack.c.bf16 %v1630, %v1617
  %v1750 = vpack.c.bf16 %v1635, %v1632
  %v1751 = vpack.c.bf16 %v1640, %v1637
  %v1752 = vpack.c.bf16 %v1645, %v1642
  %v1753 = vpack.c.bf16 %v1660, %v1658
  %v1754 = vpack.c.bf16 %v1665, %v1663
  %v1755 = vpack.c.bf16 %v1670, %v1668
  %v1756 = vpack.c.bf16 %v1686, %v1673
  %v1757 = vpack.c.bf16 %v1691, %v1688
  %v1758 = vpack.c.bf16 %v1696, %v1693
  %v1759 = vpack.c.bf16 %v1701, %v1698
  %v1760 = vpack.c.bf16 %v1716, %v1714
  %v1761 = vpack.c.bf16 %v1721, %v1719
  %v1762 = vpack.c.bf16 %v1726, %v1724
  %v1763 = vpack.c.bf16 %v1729, %v1729
  %v1764 = vld [vmem:[%s8] sm:$0xff]
  %v1765 = vld [vmem:[%s8 + $0x8] sm:$0xff]
  %v1766 = vld [vmem:[%s8 + $0x10] sm:$0xff]
  %v1767 = vld [vmem:[%s8 + $0x18] sm:$0xff]
  %v1768 = vld [vmem:[%s8 + $0x20] sm:$0xff]
  %v1769 = vld [vmem:[%s8 + $0x28] sm:$0xff]
  %v1770 = vld [vmem:[%s8 + $0x30] sm:$0xff]
  %v1771 = vld [vmem:[%s8 + $0x38] sm:$0xff]
  %v1772 = vld [vmem:[%s8 + $0x40] sm:$0xff]
  %v1773 = vld [vmem:[%s8 + $0x48] sm:$0xff]
  %v1774 = vld [vmem:[%s8 + $0x50] sm:$0xff]
  %v1775 = vld [vmem:[%s8 + $0x58] sm:$0xff]
  %v1776 = vld [vmem:[%s8 + $0x60] sm:$0xff]
  %v1777 = vld [vmem:[%s8 + $0x68] sm:$0xff]
  %v1792 = vunpack.c.l.b16 %v1764
  %v1793 = vunpack.c.h.b16 %v1764
  %v1794 = vunpack.c.l.b16 %v1765
  %v1795 = vunpack.c.h.b16 %v1765
  %v1796 = vunpack.c.l.b16 %v1766
  %v1797 = vunpack.c.h.b16 %v1766
  %v1798 = vunpack.c.l.b16 %v1767
  %v1799 = vunpack.c.h.b16 %v1767
  %v1800 = vunpack.c.l.b16 %v1768
  %v1801 = vunpack.c.h.b16 %v1768
  %v1802 = vunpack.c.l.b16 %v1769
  %v1803 = vunpack.c.h.b16 %v1769
  %v1804 = vunpack.c.l.b16 %v1770
  %v1805 = vunpack.c.h.b16 %v1770
  %v1806 = vunpack.c.l.b16 %v1771
  %v1807 = vunpack.c.h.b16 %v1771
  %v1808 = vunpack.c.l.b16 %v1772
  %v1809 = vunpack.c.h.b16 %v1772
  %v1810 = vunpack.c.l.b16 %v1773
  %v1811 = vunpack.c.h.b16 %v1773
  %v1812 = vunpack.c.l.b16 %v1774
  %v1813 = vunpack.c.h.b16 %v1774
  %v1814 = vunpack.c.l.b16 %v1775
  %v1815 = vunpack.c.h.b16 %v1775
  %v1816 = vunpack.c.l.b16 %v1776
  %v1817 = vunpack.c.h.b16 %v1776
  %v1818 = vunpack.c.l.b16 %v1777
  %v1819 = vunpack.c.h.b16 %v1777
  %v1820 = vpack.c.b16 %v1796, %v1792
  %v1821 = vpack.c.b16 %v1797, %v1793
  %v1822 = vpack.c.b16 %v1798, %v1794
  %v1823 = vpack.c.b16 %v1799, %v1795
  %v1824 = vpack.c.b16 %v1804, %v1800
  %v1825 = vpack.c.b16 %v1805, %v1801
  %v1826 = vpack.c.b16 %v1806, %v1802
  %v1827 = vpack.c.b16 %v1807, %v1803
  %v1828 = vpack.c.b16 %v1812, %v1808
  %v1829 = vpack.c.b16 %v1813, %v1809
  %v1830 = vpack.c.b16 %v1814, %v1810
  %v1831 = vpack.c.b16 %v1815, %v1811
  %v1832 = vpack.c.b16 %v1816, %v1816
  %v1833 = vpack.c.b16 %v1817, %v1817
  %v1834 = vpack.c.b16 %v1818, %v1818
  %v1835 = vpack.c.b16 %v1819, %v1819
  %vm1848 = vcmask 982016
  %v1850 = vsel %vm1848, %v1823, 0
  %v1853 = vsel %vm1848, %v1827, 0
  %v1856 = vsel %vm1848, %v1831, 0
  %v1859 = vsel %vm1848, %v1835, 0
  %v1862 = vsel %vm698, %v1763, 0
  %1864 = vmatpush.bf16.msra.mxu0 %v1739
  %1865 = vmatpush.bf16.msra.mxu0 %v1738
  %1866 = vmatpush.bf16.msra.mxu0 %v1737
  %1867 = vmatpush.bf16.msra.mxu0 %v1736
  %1868 = vmatpush.bf16.msra.mxu0 %v1735
  %1869 = vmatpush.bf16.msra.mxu0 %v1734
  %1870 = vmatpush.bf16.msra.mxu0 %v1733
  %1871 = vmatpush.bf16.msra.mxu0 %v1732
  %1872 = vmatmul.bf16.gmra.mxu0 %v1820
  %v1873 = vpop.f32.mrf.mxu0
  %v1874 = vadd.f32 0.0, %v1873
  %v1875 = vpop.f32.mrf.mxu0
  %v1876 = vadd.f32 0.0, %v1875
  %1877 = vmatmul.bf16.gmra.mxu0 %v1824
  %v1878 = vpop.f32.mrf.mxu0
  %v1879 = vadd.f32 0.0, %v1878
  %v1880 = vpop.f32.mrf.mxu0
  %v1881 = vadd.f32 0.0, %v1880
  %1882 = vmatmul.bf16.gmra.mxu0 %v1828
  %v1883 = vpop.f32.mrf.mxu0
  %v1884 = vadd.f32 0.0, %v1883
  %v1885 = vpop.f32.mrf.mxu0
  %v1886 = vadd.f32 0.0, %v1885
  %1887 = vmatmul.bf16.gmra.mxu0 %v1832
  %v1888 = vpop.f32.mrf.mxu0
  %v1889 = vadd.f32 0.0, %v1888
  %v1890 = vpop.f32.mrf.mxu0
  %1891 = vdwg.mxu0
  %1892 = vmatpush.bf16.msra.mxu0 %v1747
  %1893 = vmatpush.bf16.msra.mxu0 %v1746
  %1894 = vmatpush.bf16.msra.mxu0 %v1745
  %1895 = vmatpush.bf16.msra.mxu0 %v1744
  %1896 = vmatpush.bf16.msra.mxu0 %v1743
  %1897 = vmatpush.bf16.msra.mxu0 %v1742
  %1898 = vmatpush.bf16.msra.mxu0 %v1741
  %1899 = vmatpush.bf16.msra.mxu0 %v1740
  %1900 = vmatmul.bf16.gmra.mxu0 %v1821
  %v1901 = vpop.f32.mrf.mxu0
  %v1902 = vadd.f32 %v1874, %v1901
  %v1903 = vpop.f32.mrf.mxu0
  %v1904 = vadd.f32 %v1876, %v1903
  %1905 = vmatmul.bf16.gmra.mxu0 %v1825
  %v1906 = vpop.f32.mrf.mxu0
  %v1907 = vadd.f32 %v1879, %v1906
  %v1908 = vpop.f32.mrf.mxu0
  %v1909 = vadd.f32 %v1881, %v1908
  %1910 = vmatmul.bf16.gmra.mxu0 %v1829
  %v1911 = vpop.f32.mrf.mxu0
  %v1912 = vadd.f32 %v1884, %v1911
  %v1913 = vpop.f32.mrf.mxu0
  %v1914 = vadd.f32 %v1886, %v1913
  %1915 = vmatmul.bf16.gmra.mxu0 %v1833
  %v1916 = vpop.f32.mrf.mxu0
  %v1917 = vadd.f32 %v1889, %v1916
  %v1918 = vpop.f32.mrf.mxu0
  %1919 = vdwg.mxu0
  %1920 = vmatpush.bf16.msra.mxu0 %v1755
  %1921 = vmatpush.bf16.msra.mxu0 %v1754
  %1922 = vmatpush.bf16.msra.mxu0 %v1753
  %1923 = vmatpush.bf16.msra.mxu0 %v1752
  %1924 = vmatpush.bf16.msra.mxu0 %v1751
  %1925 = vmatpush.bf16.msra.mxu0 %v1750
  %1926 = vmatpush.bf16.msra.mxu0 %v1749
  %1927 = vmatpush.bf16.msra.mxu0 %v1748
  %1928 = vmatmul.bf16.gmra.mxu0 %v1822
  %v1929 = vpop.f32.mrf.mxu0
  %v1930 = vadd.f32 %v1902, %v1929
  %v1931 = vpop.f32.mrf.mxu0
  %v1932 = vadd.f32 %v1904, %v1931
  %1933 = vmatmul.bf16.gmra.mxu0 %v1826
  %v1934 = vpop.f32.mrf.mxu0
  %v1935 = vadd.f32 %v1907, %v1934
  %v1936 = vpop.f32.mrf.mxu0
  %v1937 = vadd.f32 %v1909, %v1936
  %1938 = vmatmul.bf16.gmra.mxu0 %v1830
  %v1939 = vpop.f32.mrf.mxu0
  %v1940 = vadd.f32 %v1912, %v1939
  %v1941 = vpop.f32.mrf.mxu0
  %v1942 = vadd.f32 %v1914, %v1941
  %1943 = vmatmul.bf16.gmra.mxu0 %v1834
  %v1944 = vpop.f32.mrf.mxu0
  %v1945 = vadd.f32 %v1917, %v1944
  %v1946 = vpop.f32.mrf.mxu0
  %1947 = vdwg.mxu0
  %1948 = vmatpush.bf16.msra.mxu0 %v1862
  %1949 = vmatpush.bf16.msra.mxu0 %v1762
  %1950 = vmatpush.bf16.msra.mxu0 %v1761
  %1951 = vmatpush.bf16.msra.mxu0 %v1760
  %1952 = vmatpush.bf16.msra.mxu0 %v1759
  %1953 = vmatpush.bf16.msra.mxu0 %v1758
  %1954 = vmatpush.bf16.msra.mxu0 %v1757
  %1955 = vmatpush.bf16.msra.mxu0 %v1756
  %1956 = vmatmul.bf16.gmra.mxu0 %v1850
  %v1957 = vpop.f32.mrf.mxu0
  %v1958 = vadd.f32 %v1930, %v1957
  %v1959 = vpop.f32.mrf.mxu0
  %v1960 = vadd.f32 %v1932, %v1959
  %1961 = vmatmul.bf16.gmra.mxu0 %v1853
  %v1962 = vpop.f32.mrf.mxu0
  %v1963 = vadd.f32 %v1935, %v1962
  %v1964 = vpop.f32.mrf.mxu0
  %v1965 = vadd.f32 %v1937, %v1964
  %1966 = vmatmul.bf16.gmra.mxu0 %v1856
  %v1967 = vpop.f32.mrf.mxu0
  %v1968 = vadd.f32 %v1940, %v1967
  %v1969 = vpop.f32.mrf.mxu0
  %v1970 = vadd.f32 %v1942, %v1969
  %1971 = vmatmul.bf16.gmra.mxu0 %v1859
  %v1972 = vpop.f32.mrf.mxu0
  %v1973 = vadd.f32 %v1945, %v1972
  %v1974 = vpop.f32.mrf.mxu0
  %1975 = vdwg.mxu0
  %v1976 = vtanh.pop %v1958
  %v1977 = vtanh.pop %v1960
  %v1978 = vtanh.pop %v1963
  %v1979 = vtanh.pop %v1965
  %v1980 = vtanh.pop %v1968
  %v1981 = vtanh.pop %v1970
  %v1982 = vtanh.pop %v1973
  %1983 = vst [vmem:[%s10] sm:$0xff] %v1976
  %1984 = vst [vmem:[%s10 + $0x8] sm:$0xff] %v1977
  %1985 = vst [vmem:[%s10 + $0x10] sm:$0xff] %v1978
  %1986 = vst [vmem:[%s10 + $0x18] sm:$0xff] %v1979
  %1987 = vst [vmem:[%s10 + $0x20] sm:$0xff] %v1980
  %1988 = vst [vmem:[%s10 + $0x28] sm:$0xff] %v1981
  %1989 = vst [vmem:[%s10 + $0x30] sm:$0xff] %v1982
  // Predicated region
  $region42: #{netGv_forward.1} parent=0 // pred_check
    _
  $region43: #{netGv_forward.1} parent=0 // pred_check_branch
    %1991 = sbr.rel (0) target = $region45
  $region44: #{netGv_forward.1} parent=0 // pred_region
    _
  $region45: #{netGv_forward.1} parent=0 // pred_fallthru
    _
  // Predicated region
  $region46: #{netGv_forward.1} parent=0 // pred_check
    _
  $region47: #{netGv_forward.1} parent=0 // pred_check_branch
    %1993 = sbr.rel (0) target = $region49
  $region48: #{netGv_forward.1} parent=0 // pred_region
    _
  $region49: #{netGv_forward.1} parent=0 // pred_fallthru
    _

</llo_original>
